<compile_context>
chip_gen: v6e
topology: v6e:2x2x1
jax: 0.10.0
libtpu: 0.0.40
codegen_flags: <defaults>
</compile_context>

<pallas_src>
import functools

import jax
import jax.numpy as jnp
from jax.experimental import pallas as pl
from jax.experimental.pallas import tpu as pltpu


def _dot(a, b):
    return jnp.dot(a, b, preferred_element_type=jnp.float32)


def _dot_nt(a, b):
    """a: (M, K), b: (N, K) -> a @ b.T, f32 accumulation on the MXU."""
    return jax.lax.dot_general(
        a, b, dimension_numbers=(((1,), (1,)), ((), ())),
        preferred_element_type=jnp.float32)


def gcn_attention_v2_kernel(adj0_ref, adj1_ref, adj2_ref, xw_ref, w_ref, b_ref,
                            out_ref, nj_t_ref, *, nfeat, nhid, nclass):
    bf16 = jnp.bfloat16
    A0 = adj0_ref[...]
    A1 = adj1_ref[...]
    A2 = adj2_ref[...]

    # ---- static slices of the packed small inputs (all tiny) ----
    x_b = xw_ref[:, 0:nfeat]                          # (N, nfeat)   bf16
    wct0 = xw_ref[:, nfeat:nfeat + 8]                 # (N, 8)       bf16, cols 3:8 zero
    wct1 = xw_ref[:, nfeat + 8:nfeat + 16]
    wct2 = xw_ref[:, nfeat + 16:nfeat + 24]
    wg1 = w_ref[0:nfeat, 0:nhid]                      # (nfeat, nhid)      bf16
    wqkv = w_ref[0:nhid, nhid:4 * nhid]               # (nhid, 3*nhid)     bf16
    wg2 = w_ref[0:nhid, 4 * nhid:4 * nhid + nclass]   # (nhid, nclass)     bf16
    bc = b_ref[:, 0:8]                                # (1, 8) f32, cols 3:8 zero
    bg1 = b_ref[:, 8:8 + nhid]
    bqkv = b_ref[:, 8 + nhid:8 + 4 * nhid]
    bg2 = b_ref[:, 8 + 4 * nhid:8 + 4 * nhid + nclass]

    # ---- mixing-weight branch (W_agg folded into Wc_k in the wrapper) ----
    # z4 = agg(cat(atten_k(A_k))) == sum_k A_k @ Wc_k^T + bc   (lanes 3:8 are zero padding)
    z4p = (_dot(A0.astype(bf16), wct0) + _dot(A1.astype(bf16), wct1)
           + _dot(A2.astype(bf16), wct2) + bc)        # (N, 8) f32
    z4_t = jnp.transpose(z4p)[0:3, :]                 # (3, N) — tiny XLU transpose only
    e4 = jnp.exp(z4_t - jnp.max(z4_t, axis=0, keepdims=True))
    nz_t = e4 / jnp.sum(e4, axis=0, keepdims=True)    # softmax(z4, dim=1), transposed; exact
    nj_t_ref[...] = nz_t

    # adj[i, j] = sum_k nz[j, k] * A_k[i, j]  (PyTorch nz[:, k] * A_k scales COLUMNS)
    adj = nz_t[0:1, :] * A0 + nz_t[1:2, :] * A1 + nz_t[2:3, :] * A2

    # ---- gcn1 + relu:  h = relu(adj @ (x @ W1) + b1) ----
    xw1 = _dot(x_b, wg1)                              # (N, nhid) f32
    h = jnp.maximum(_dot(adj.astype(bf16), xw1.astype(bf16)) + bg1, 0.0)

    # ---- fused Q/K/V projection, static lane slices ----
    qkv = _dot(h.astype(bf16), wqkv) + bqkv           # (N, 3*nhid) f32
    Qh = qkv[:, 0:nhid].astype(bf16)
    Kh = qkv[:, nhid:2 * nhid].astype(bf16)
    Vh = qkv[:, 2 * nhid:3 * nhid].astype(bf16)

    # ---- graph self-attention: row softmax, denominator via EUP reciprocal ----
    scores = _dot_nt(Qh, Kh)                          # Q_h @ K_h^T  (N, N) f32
    a_t = adj * scores
    er = jnp.exp(a_t - jnp.max(a_t, axis=1, keepdims=True))
    attention = er * pl.reciprocal(jnp.sum(er, axis=1, keepdims=True), approx=True)

    # gcn_norm elided: symmetric D^-1/2 A D^-1/2 of a row-stochastic (row-softmax) matrix
    # is the identity, so the dense-diagonal matmul would do zero useful work.
    # TODO(synk): gcn_norm's definition is not in the provided snippet; if it adds
    #             self-loops or normalizes pre-softmax, reinstate it here as an
    #             elementwise row/col scale (never as a dense diagonal matmul).

    X_tilde = jnp.maximum(_dot(attention.astype(bf16), Vh), 0.0)   # (N, nhid) f32

    # ---- gcn2 + final row softmax (exact so row sums stay tight) ----
    xw2 = _dot(X_tilde.astype(bf16), wg2)             # (N, nclass) f32
    z = _dot(adj.astype(bf16), xw2.astype(bf16)) + bg2
    ez = jnp.exp(z - jnp.max(z, axis=1, keepdims=True))
    out_ref[...] = ez / jnp.sum(ez, axis=1, keepdims=True)


@jax.jit
def gcn_attention_v2_forward(adj0, adj1, adj2, x, params):
    N = adj0.shape[0]
    nfeat = x.shape[1]
    nhid = params["wg1"].shape[1]
    nclass = params["wg2"].shape[1]
    bf16 = jnp.bfloat16

    # ---- fold agg into atten, then pack; all traced once under jit ----
    # z4 = sum_k (A_k @ wa_k^T + ba_k^T) @ wagg_k^T + bagg^T = sum_k A_k @ Wc_k^T + bc
    wct = []
    bc = params["bagg"]                                        # (3, 1)
    for wagg_k, wa_k, ba_k in (
            (params["wagg_a"], params["wa1"], params["ba1"]),
            (params["wagg_b"], params["wa2"], params["ba2"]),
            (params["wagg_c"], params["wa3"], params["ba3"])):
        wc_k = wagg_k @ wa_k                                   # (3, N) f32
        bc = bc + wagg_k @ ba_k                                # (3, 1) f32
        wct.append(jnp.pad(wc_k.T, ((0, 0), (0, 5))).astype(bf16))   # (N, 8), cols 3:8 zero
    bc_row = jnp.pad(bc.T, ((0, 0), (0, 5)))                   # (1, 8) f32

    # packed node slab: [x | Wc0^T | Wc1^T | Wc2^T]  ->  (N, nfeat + 24) bf16
    xw = jnp.concatenate([x.astype(bf16)] + wct, axis=1)

    # packed bf16 weight slab: [gcn1 | Q|K|V | gcn2]  ->  (max(nfeat, nhid), 4*nhid + nclass)
    rows = max(nfeat, nhid)
    wqkv = jnp.concatenate([params["wq"], params["wk"], params["wv"]], axis=1)
    w_all = jnp.zeros((rows, 4 * nhid + nclass), bf16)
    w_all = w_all.at[0:nfeat, 0:nhid].set(params["wg1"].astype(bf16))
    w_all = w_all.at[0:nhid, nhid:4 * nhid].set(wqkv.astype(bf16))
    w_all = w_all.at[0:nhid, 4 * nhid:4 * nhid + nclass].set(params["wg2"].astype(bf16))

    # packed f32 bias row: [bc(8) | bg1 | bqkv | bg2]
    bqkv = jnp.concatenate([params["bq"], params["bk"], params["bv"]], axis=1)
    b_all = jnp.concatenate([bc_row, params["bg1"], bqkv, params["bg2"]], axis=1)

    # ---- generation-aware scoped-VMEM limit (never exceeds physical VMEM, e.g. 64 MiB v7x) ----
    try:
        vmem_cap = int(pltpu.get_tpu_info().vmem_capacity_bytes)
    except Exception:
        vmem_cap = 64 * 2**20                                  # conservative (v7x) fallback
    need = 46 * N * N + (4 << 20)      # ~46 B/elem of simultaneously-live N^2 state + headroom
    vmem_limit = min(int(vmem_cap * 0.85), max(32 * 2**20, need))
    # TODO(synk): if `need` exceeds the budget, switch to the row-tiled multi-pass pipeline
    #             described at the top of this file instead of the single fused call.

    flops = (2.0 * N * N * (3 * 8 + 3 * nhid + nclass)
             + 2.0 * N * (nfeat * nhid + 3 * nhid * nhid + nhid * nclass))
    bytes_accessed = (4 * (3 * N * N + N * nclass + 3 * N)
                      + 2 * (N * (nfeat + 24) + rows * (4 * nhid + nclass))
                      + 4 * (8 + 4 * nhid + nclass))
    cost = pl.CostEstimate(flops=int(flops),
                           transcendentals=int(N * N + N * (nclass + 3)),
                           bytes_accessed=int(bytes_accessed))

    vmem = pl.BlockSpec(memory_space=pltpu.MemorySpace.VMEM)
    kernel = functools.partial(gcn_attention_v2_kernel,
                               nfeat=nfeat, nhid=nhid, nclass=nclass)
    out, nj_t = pl.pallas_call(
        kernel,
        out_shape=(jax.ShapeDtypeStruct((N, nclass), jnp.float32),
                   jax.ShapeDtypeStruct((3, N), jnp.float32)),
        in_specs=[vmem] * 6,
        out_specs=(vmem, vmem),
        compiler_params=pltpu.CompilerParams(vmem_limit_bytes=vmem_limit),
        cost_estimate=cost,
    )(adj0, adj1, adj2, xw, w_all, b_all)
    return out, nj_t.T  # nj back to the PyTorch (N, 3) layout


def init_params(key, N, nfeat, nhid, nclass):
    ks = jax.random.split(key, 20)

    def u(k, shape, fan_in):
        lim = 1.0 / jnp.sqrt(jnp.float32(fan_in))
        return jax.random.uniform(k, shape, jnp.float32, -lim, lim)

    return {
        # atten / atten2 / atten3: Linear(N, 5) in PyTorch [out, in] layout
        "wa1": u(ks[0], (5, N), N), "ba1": u(ks[1], (5, 1), N),
        "wa2": u(ks[2], (5, N), N), "ba2": u(ks[3], (5, 1), N),
        "wa3": u(ks[4], (5, N), N), "ba3": u(ks[5], (5, 1), N),
        # agg: Linear(15, 3), weight (3, 15) split into three (3, 5) chunks
        "wagg_a": u(ks[6], (3, 5), 15),
        "wagg_b": u(ks[7], (3, 5), 15),
        "wagg_c": u(ks[8], (3, 5), 15),
        "bagg": u(ks[9], (3, 1), 15),
        # GraphConvolution(nfeat, nhid): weight stored [in, out]
        "wg1": u(ks[10], (nfeat, nhid), nfeat), "bg1": u(ks[11], (1, nhid), nfeat),
        # Q / K / V Linear(nhid, nhid): stored [in, out] (== PyTorch W^T)
        "wq": u(ks[12], (nhid, nhid), nhid), "bq": u(ks[13], (1, nhid), nhid),
        "wk": u(ks[14], (nhid, nhid), nhid), "bk": u(ks[15], (1, nhid), nhid),
        "wv": u(ks[16], (nhid, nhid), nhid), "bv": u(ks[17], (1, nhid), nhid),
        # GraphConvolution(nhid, nclass)
        "wg2": u(ks[18], (nhid, nclass), nhid), "bg2": u(ks[19], (1, nclass), nhid),
    }


if __name__ == "__main__":
    N, nfeat, nhid, nclass = 128, 16, 32, 8

    key = jax.random.PRNGKey(0)
    k_a0, k_a1, k_a2, k_x, k_p = jax.random.split(key, 5)

    # Deterministic, somewhat sparse non-negative adjacency matrices and node features.
    def make_adj(k):
        a = jax.random.uniform(k, (N, N), jnp.float32)
        return jnp.where(a > 0.7, a, 0.0)

    adj0 = make_adj(k_a0)
    adj1 = make_adj(k_a1)
    adj2 = make_adj(k_a2)
    x = jax.random.normal(k_x, (N, nfeat), jnp.float32)

    params = init_params(k_p, N, nfeat, nhid, nclass)

    out, nj = gcn_attention_v2_forward(adj0, adj1, adj2, x, params)
    jax.block_until_ready((out, nj))

    assert out.shape == (N, nclass) and nj.shape == (N, 3)
    assert bool(jnp.all(jnp.isfinite(out))) and bool(jnp.all(jnp.isfinite(nj)))
    # both outputs are row-stochastic softmaxes
    assert bool(jnp.allclose(jnp.sum(out, axis=1), 1.0, atol=1e-4))
    assert bool(jnp.allclose(jnp.sum(nj, axis=1), 1.0, atol=1e-4))

    print("KERNEL_OK")
</pallas_src>

<mosaic_0001>
module attributes {stable_mosaic.version = 11 : i64} {
  func.func @gcn_attention_v2_kernel(%arg0: memref<128x128xf32, #tpu.memory_space<vmem>>, %arg1: memref<128x128xf32, #tpu.memory_space<vmem>>, %arg2: memref<128x128xf32, #tpu.memory_space<vmem>>, %arg3: memref<128x40xbf16, #tpu.memory_space<vmem>>, %arg4: memref<32x136xbf16, #tpu.memory_space<vmem>>, %arg5: memref<1x144xf32, #tpu.memory_space<vmem>>, %arg6: memref<128x8xf32, #tpu.memory_space<vmem>>, %arg7: memref<3x128xf32, #tpu.memory_space<vmem>>) attributes {dimension_semantics = [], scalar_prefetch = 0 : i64, scratch_operands = 0 : i64, tpu.core_type = #tpu.core_type<tc>} {
    %c0 = arith.constant 0 : index
    %c0_0 = arith.constant 0 : index
    %0 = vector.load %arg0[%c0, %c0_0] : memref<128x128xf32, #tpu.memory_space<vmem>>, vector<128x128xf32>
    %c0_1 = arith.constant 0 : index
    %c0_2 = arith.constant 0 : index
    %1 = vector.load %arg1[%c0_1, %c0_2] : memref<128x128xf32, #tpu.memory_space<vmem>>, vector<128x128xf32>
    %c0_3 = arith.constant 0 : index
    %c0_4 = arith.constant 0 : index
    %2 = vector.load %arg2[%c0_3, %c0_4] : memref<128x128xf32, #tpu.memory_space<vmem>>, vector<128x128xf32>
    %c0_5 = arith.constant 0 : index
    %c0_6 = arith.constant 0 : index
    %3 = vector.load %arg3[%c0_5, %c0_6] : memref<128x40xbf16, #tpu.memory_space<vmem>>, vector<128x16xbf16>
    %c0_7 = arith.constant 0 : index
    %c16 = arith.constant 16 : index
    %4 = vector.load %arg3[%c0_7, %c16] : memref<128x40xbf16, #tpu.memory_space<vmem>>, vector<128x8xbf16>
    %c0_8 = arith.constant 0 : index
    %c24 = arith.constant 24 : index
    %5 = vector.load %arg3[%c0_8, %c24] : memref<128x40xbf16, #tpu.memory_space<vmem>>, vector<128x8xbf16>
    %c0_9 = arith.constant 0 : index
    %c32 = arith.constant 32 : index
    %6 = vector.load %arg3[%c0_9, %c32] : memref<128x40xbf16, #tpu.memory_space<vmem>>, vector<128x8xbf16>
    %c0_10 = arith.constant 0 : index
    %c0_11 = arith.constant 0 : index
    %7 = vector.load %arg4[%c0_10, %c0_11] : memref<32x136xbf16, #tpu.memory_space<vmem>>, vector<16x32xbf16>
    %c0_12 = arith.constant 0 : index
    %c32_13 = arith.constant 32 : index
    %8 = vector.load %arg4[%c0_12, %c32_13] : memref<32x136xbf16, #tpu.memory_space<vmem>>, vector<32x96xbf16>
    %c0_14 = arith.constant 0 : index
    %c128 = arith.constant 128 : index
    %9 = vector.load %arg4[%c0_14, %c128] : memref<32x136xbf16, #tpu.memory_space<vmem>>, vector<32x8xbf16>
    %c0_15 = arith.constant 0 : index
    %c0_16 = arith.constant 0 : index
    %10 = vector.load %arg5[%c0_15, %c0_16] : memref<1x144xf32, #tpu.memory_space<vmem>>, vector<1x8xf32>
    %c0_17 = arith.constant 0 : index
    %c8 = arith.constant 8 : index
    %11 = vector.load %arg5[%c0_17, %c8] : memref<1x144xf32, #tpu.memory_space<vmem>>, vector<1x32xf32>
    %c0_18 = arith.constant 0 : index
    %c40 = arith.constant 40 : index
    %12 = vector.load %arg5[%c0_18, %c40] : memref<1x144xf32, #tpu.memory_space<vmem>>, vector<1x96xf32>
    %c0_19 = arith.constant 0 : index
    %c136 = arith.constant 136 : index
    %13 = vector.load %arg5[%c0_19, %c136] : memref<1x144xf32, #tpu.memory_space<vmem>>, vector<1x8xf32>
    %14 = arith.truncf %0 : vector<128x128xf32> to vector<128x128xbf16>
    %cst = arith.constant dense<0.000000e+00> : vector<128x8xf32>
    %15 = tpu.matmul %14, %4, %cst {dimension_numbers = #tpu.dot_dimension_numbers<[1], [0], [0], [1], [0, 0, 1, 1], [], []>} : vector<128x128xbf16>, vector<128x8xbf16>, vector<128x8xf32> -> vector<128x8xf32>
    %16 = arith.truncf %1 : vector<128x128xf32> to vector<128x128xbf16>
    %cst_20 = arith.constant dense<0.000000e+00> : vector<128x8xf32>
    %17 = tpu.matmul %16, %5, %cst_20 {dimension_numbers = #tpu.dot_dimension_numbers<[1], [0], [0], [1], [0, 0, 1, 1], [], []>} : vector<128x128xbf16>, vector<128x8xbf16>, vector<128x8xf32> -> vector<128x8xf32>
    %18 = arith.addf %15, %17 : vector<128x8xf32>
    %19 = arith.truncf %2 : vector<128x128xf32> to vector<128x128xbf16>
    %cst_21 = arith.constant dense<0.000000e+00> : vector<128x8xf32>
    %20 = tpu.matmul %19, %6, %cst_21 {dimension_numbers = #tpu.dot_dimension_numbers<[1], [0], [0], [1], [0, 0, 1, 1], [], []>} : vector<128x128xbf16>, vector<128x8xbf16>, vector<128x8xf32> -> vector<128x8xf32>
    %21 = arith.addf %18, %20 : vector<128x8xf32>
    %22 = vector.broadcast %10 : vector<1x8xf32> to vector<128x8xf32>
    %23 = arith.addf %21, %22 : vector<128x8xf32>
    %24 = tpu.transpose %23, [1, 0] : vector<128x8xf32> -> vector<8x128xf32>
    %25 = vector.extract_strided_slice %24 {offsets = [0, 0], sizes = [3, 128], strides = [1, 1]} : vector<8x128xf32> to vector<3x128xf32>
    %cst_22 = arith.constant dense<0xFF800000> : vector<128xf32>
    %26 = vector.multi_reduction <maximumf>, %25, %cst_22 [0] : vector<3x128xf32> to vector<128xf32>
    %27 = vector.shape_cast %26 : vector<128xf32> to vector<1x128xf32>
    %28 = vector.broadcast %27 : vector<1x128xf32> to vector<3x128xf32>
    %29 = arith.subf %25, %28 : vector<3x128xf32>
    %30 = math.exp %29 : vector<3x128xf32>
    %cst_23 = arith.constant dense<0.000000e+00> : vector<128xf32>
    %31 = vector.multi_reduction <add>, %30, %cst_23 [0] : vector<3x128xf32> to vector<128xf32>
    %32 = vector.shape_cast %31 : vector<128xf32> to vector<1x128xf32>
    %33 = vector.broadcast %32 : vector<1x128xf32> to vector<3x128xf32>
    %34 = arith.divf %30, %33 : vector<3x128xf32>
    %c0_24 = arith.constant 0 : index
    %c0_25 = arith.constant 0 : index
    %35 = vector.load %arg7[%c0_24, %c0_25] : memref<3x128xf32, #tpu.memory_space<vmem>>, vector<3x128xf32>
    tpu.vector_store %arg7[%c0_24, %c0_25], %34 {strides = array<i32>} : memref<3x128xf32, #tpu.memory_space<vmem>>, vector<3x128xf32>,
    %36 = vector.extract_strided_slice %34 {offsets = [0, 0], sizes = [1, 128], strides = [1, 1]} : vector<3x128xf32> to vector<1x128xf32>
    %37 = vector.broadcast %36 : vector<1x128xf32> to vector<128x128xf32>
    %38 = arith.mulf %37, %0 : vector<128x128xf32>
    %39 = vector.extract_strided_slice %34 {offsets = [1, 0], sizes = [1, 128], strides = [1, 1]} : vector<3x128xf32> to vector<1x128xf32>
    %40 = vector.broadcast %39 : vector<1x128xf32> to vector<128x128xf32>
    %41 = arith.mulf %40, %1 : vector<128x128xf32>
    %42 = arith.addf %38, %41 : vector<128x128xf32>
    %43 = vector.extract_strided_slice %34 {offsets = [2, 0], sizes = [1, 128], strides = [1, 1]} : vector<3x128xf32> to vector<1x128xf32>
    %44 = vector.broadcast %43 : vector<1x128xf32> to vector<128x128xf32>
    %45 = arith.mulf %44, %2 : vector<128x128xf32>
    %46 = arith.addf %42, %45 : vector<128x128xf32>
    %cst_26 = arith.constant dense<0.000000e+00> : vector<128x32xf32>
    %47 = tpu.matmul %3, %7, %cst_26 {dimension_numbers = #tpu.dot_dimension_numbers<[1], [0], [0], [1], [0, 0, 1, 1], [], []>} : vector<128x16xbf16>, vector<16x32xbf16>, vector<128x32xf32> -> vector<128x32xf32>
    %48 = arith.truncf %46 : vector<128x128xf32> to vector<128x128xbf16>
    %49 = arith.truncf %47 : vector<128x32xf32> to vector<128x32xbf16>
    %cst_27 = arith.constant dense<0.000000e+00> : vector<128x32xf32>
    %50 = tpu.matmul %48, %49, %cst_27 {dimension_numbers = #tpu.dot_dimension_numbers<[1], [0], [0], [1], [0, 0, 1, 1], [], []>} : vector<128x128xbf16>, vector<128x32xbf16>, vector<128x32xf32> -> vector<128x32xf32>
    %51 = vector.broadcast %11 : vector<1x32xf32> to vector<128x32xf32>
    %52 = arith.addf %50, %51 : vector<128x32xf32>
    %cst_28 = arith.constant 0.000000e+00 : f32
    %53 = vector.broadcast %cst_28 : f32 to vector<128x32xf32>
    %54 = arith.maximumf %52, %53 : vector<128x32xf32>
    %55 = arith.truncf %54 : vector<128x32xf32> to vector<128x32xbf16>
    %cst_29 = arith.constant dense<0.000000e+00> : vector<128x96xf32>
    %56 = tpu.matmul %55, %8, %cst_29 {dimension_numbers = #tpu.dot_dimension_numbers<[1], [0], [0], [1], [0, 0, 1, 1], [], []>} : vector<128x32xbf16>, vector<32x96xbf16>, vector<128x96xf32> -> vector<128x96xf32>
    %57 = vector.broadcast %12 : vector<1x96xf32> to vector<128x96xf32>
    %58 = arith.addf %56, %57 : vector<128x96xf32>
    %59 = vector.extract_strided_slice %58 {offsets = [0, 0], sizes = [128, 32], strides = [1, 1]} : vector<128x96xf32> to vector<128x32xf32>
    %60 = arith.truncf %59 : vector<128x32xf32> to vector<128x32xbf16>
    %61 = vector.extract_strided_slice %58 {offsets = [0, 32], sizes = [128, 32], strides = [1, 1]} : vector<128x96xf32> to vector<128x32xf32>
    %62 = arith.truncf %61 : vector<128x32xf32> to vector<128x32xbf16>
    %63 = vector.extract_strided_slice %58 {offsets = [0, 64], sizes = [128, 32], strides = [1, 1]} : vector<128x96xf32> to vector<128x32xf32>
    %64 = arith.truncf %63 : vector<128x32xf32> to vector<128x32xbf16>
    %cst_30 = arith.constant dense<0.000000e+00> : vector<128x128xf32>
    %65 = tpu.matmul %60, %62, %cst_30 {dimension_numbers = #tpu.dot_dimension_numbers<[1], [1], [0], [0], [0, 0, 1, 0], [], []>} : vector<128x32xbf16>, vector<128x32xbf16>, vector<128x128xf32> -> vector<128x128xf32>
    %66 = arith.mulf %46, %65 : vector<128x128xf32>
    %cst_31 = arith.constant dense<0xFF800000> : vector<128xf32>
    %67 = vector.multi_reduction <maximumf>, %66, %cst_31 [1] : vector<128x128xf32> to vector<128xf32>
    %68 = vector.shape_cast %67 : vector<128xf32> to vector<128x1xf32>
    %69 = vector.broadcast %68 : vector<128x1xf32> to vector<128x128xf32>
    %70 = arith.subf %66, %69 : vector<128x128xf32>
    %71 = math.exp %70 : vector<128x128xf32>
    %cst_32 = arith.constant dense<0.000000e+00> : vector<128xf32>
    %72 = vector.multi_reduction <add>, %71, %cst_32 [1] : vector<128x128xf32> to vector<128xf32>
    %73 = vector.shape_cast %72 : vector<128xf32> to vector<128x1xf32>
    %74 = tpu.reciprocal %73 {approx = true} : vector<128x1xf32> -> vector<128x1xf32>
    %75 = vector.broadcast %74 : vector<128x1xf32> to vector<128x128xf32>
    %76 = arith.mulf %71, %75 : vector<128x128xf32>
    %77 = arith.truncf %76 : vector<128x128xf32> to vector<128x128xbf16>
    %cst_33 = arith.constant dense<0.000000e+00> : vector<128x32xf32>
    %78 = tpu.matmul %77, %64, %cst_33 {dimension_numbers = #tpu.dot_dimension_numbers<[1], [0], [0], [1], [0, 0, 1, 1], [], []>} : vector<128x128xbf16>, vector<128x32xbf16>, vector<128x32xf32> -> vector<128x32xf32>
    %cst_34 = arith.constant 0.000000e+00 : f32
    %79 = vector.broadcast %cst_34 : f32 to vector<128x32xf32>
    %80 = arith.maximumf %78, %79 : vector<128x32xf32>
    %81 = arith.truncf %80 : vector<128x32xf32> to vector<128x32xbf16>
    %cst_35 = arith.constant dense<0.000000e+00> : vector<128x8xf32>
    %82 = tpu.matmul %81, %9, %cst_35 {dimension_numbers = #tpu.dot_dimension_numbers<[1], [0], [0], [1], [0, 0, 1, 1], [], []>} : vector<128x32xbf16>, vector<32x8xbf16>, vector<128x8xf32> -> vector<128x8xf32>
    %83 = arith.truncf %46 : vector<128x128xf32> to vector<128x128xbf16>
    %84 = arith.truncf %82 : vector<128x8xf32> to vector<128x8xbf16>
    %cst_36 = arith.constant dense<0.000000e+00> : vector<128x8xf32>
    %85 = tpu.matmul %83, %84, %cst_36 {dimension_numbers = #tpu.dot_dimension_numbers<[1], [0], [0], [1], [0, 0, 1, 1], [], []>} : vector<128x128xbf16>, vector<128x8xbf16>, vector<128x8xf32> -> vector<128x8xf32>
    %86 = vector.broadcast %13 : vector<1x8xf32> to vector<128x8xf32>
    %87 = arith.addf %85, %86 : vector<128x8xf32>
    %cst_37 = arith.constant dense<0xFF800000> : vector<128xf32>
    %88 = vector.multi_reduction <maximumf>, %87, %cst_37 [1] : vector<128x8xf32> to vector<128xf32>
    %89 = vector.shape_cast %88 : vector<128xf32> to vector<128x1xf32>
    %90 = vector.broadcast %89 : vector<128x1xf32> to vector<128x8xf32>
    %91 = arith.subf %87, %90 : vector<128x8xf32>
    %92 = math.exp %91 : vector<128x8xf32>
    %cst_38 = arith.constant dense<0.000000e+00> : vector<128xf32>
    %93 = vector.multi_reduction <add>, %92, %cst_38 [1] : vector<128x8xf32> to vector<128xf32>
    %94 = vector.shape_cast %93 : vector<128xf32> to vector<128x1xf32>
    %95 = vector.broadcast %94 : vector<128x1xf32> to vector<128x8xf32>
    %96 = arith.divf %92, %95 : vector<128x8xf32>
    %c0_39 = arith.constant 0 : index
    %c0_40 = arith.constant 0 : index
    %97 = vector.load %arg6[%c0_39, %c0_40] : memref<128x8xf32, #tpu.memory_space<vmem>>, vector<128x8xf32>
    tpu.vector_store %arg6[%c0_39, %c0_40], %96 {strides = array<i32>} : memref<128x8xf32, #tpu.memory_space<vmem>>, vector<128x8xf32>,
    return
  }
}

</mosaic_0001>

<llo_original>
// kernel: gcn_attention_v2_forward.1
$region0: #{gcn_attention_v2_forward.1}
  #allocation0 [shape = 'u32[]', space=smem, size = 0x4, offset = 0x4, fixed_abs, tag = 'smem constant byte address 0x4 - core index']
  #allocation1 [shape = 'u32[144,128]{1,0:T(1,128)}', space=vmem, size = 0x12000, scoped, tag = 'internal scratch']
  %s0 = inlined_call_operand.vmem [shape: f32[128,128], index: 0, kind: input, shape index: {}]
  %s1 = inlined_call_operand.vmem [shape: f32[128,128], index: 1, kind: input, shape index: {}]
  %s2 = inlined_call_operand.vmem [shape: f32[128,128], index: 2, kind: input, shape index: {}]
  %s3 = inlined_call_operand.vmem [shape: bf16[128,40], index: 3, kind: input, shape index: {}]
  %s4 = inlined_call_operand.vmem [shape: bf16[32,136], index: 4, kind: input, shape index: {}]
  %s5 = inlined_call_operand.vmem [shape: f32[1,144], index: 5, kind: input, shape index: {}]
  %s6 = inlined_call_operand.vmem [shape: f32[128,8], index: 6, kind: output, shape index: {0}]
  %s7 = inlined_call_operand.hbm [shape: f32[3,128], index: 7, kind: output, shape index: {1}]
  %8 = xla_tuple %s6, %s7
  %s9 = sld [smem:[#allocation0]]
  $region42: #{gcn_attention_v2_forward.1} parent=0
    _
  %s11 = ssub.s32 1, %s9
  %s12 = scalar_select 0, %s11, %s9
  $region1: #{gcn_attention_v2_forward.1} parent=0
    #allocation2 [shape = 'u8[2048]{0}', space=vmem, size = 0x800, scoped, tag = 'output window, operand 1, single buffered']
    #allocation3 [shape = 's32[1]{0}', space=sflag, size = 0x4, scoped, tag = 'scoped memory for gcn_attention_v2_forward.1']
    %13 = vsyncpa [#allocation3], 0
    // Predicated region
    $region2: #{gcn_attention_v2_forward.1} parent=1 // pred_check
      _
    $region3: #{gcn_attention_v2_forward.1} parent=1 // pred_check_branch
      %15 = sbr.rel (0) target = $region5
    $region4: #{gcn_attention_v2_forward.1} parent=1 // pred_region
      _
    $region5: #{gcn_attention_v2_forward.1} parent=1 // pred_fallthru
      _
    // Predicated region
    $region6: #{gcn_attention_v2_forward.1} parent=1 // pred_check
      _
    $region7: #{gcn_attention_v2_forward.1} parent=1 // pred_check_branch
      %17 = sbr.rel (0) target = $region9
    $region8: #{gcn_attention_v2_forward.1} parent=1 // pred_region
      _
    $region9: #{gcn_attention_v2_forward.1} parent=1 // pred_fallthru
      _
    // Predicated region
    $region10: #{gcn_attention_v2_forward.1} parent=1 // pred_check
      _
    $region11: #{gcn_attention_v2_forward.1} parent=1 // pred_check_branch
      %19 = sbr.rel (0) target = $region13
    $region12: #{gcn_attention_v2_forward.1} parent=1 // pred_region
      _
    $region13: #{gcn_attention_v2_forward.1} parent=1 // pred_fallthru
      _
    // Predicated region
    $region14: #{gcn_attention_v2_forward.1} parent=1 // pred_check
      _
    $region15: #{gcn_attention_v2_forward.1} parent=1 // pred_check_branch
      %21 = sbr.rel (0) target = $region17
    $region16: #{gcn_attention_v2_forward.1} parent=1 // pred_region
      _
    $region17: #{gcn_attention_v2_forward.1} parent=1 // pred_fallthru
      _
    // Predicated region
    $region18: #{gcn_attention_v2_forward.1} parent=1 // pred_check
      _
    $region19: #{gcn_attention_v2_forward.1} parent=1 // pred_check_branch
      %23 = sbr.rel (0) target = $region21
    $region20: #{gcn_attention_v2_forward.1} parent=1 // pred_region
      _
    $region21: #{gcn_attention_v2_forward.1} parent=1 // pred_fallthru
      _
    // Predicated region
    $region22: #{gcn_attention_v2_forward.1} parent=1 // pred_check
      _
    $region23: #{gcn_attention_v2_forward.1} parent=1 // pred_check_branch
      %25 = sbr.rel (0) target = $region25
    $region24: #{gcn_attention_v2_forward.1} parent=1 // pred_region
      _
    $region25: #{gcn_attention_v2_forward.1} parent=1 // pred_fallthru
      _
    %v27 = vld [vmem:[%s0] sm:$0xff]
    %v28 = vld [vmem:[%s0 + $0x8] sm:$0xff]
    %v29 = vld [vmem:[%s0 + $0x10] sm:$0xff]
    %v30 = vld [vmem:[%s0 + $0x18] sm:$0xff]
    %v31 = vld [vmem:[%s0 + $0x20] sm:$0xff]
    %v32 = vld [vmem:[%s0 + $0x28] sm:$0xff]
    %v33 = vld [vmem:[%s0 + $0x30] sm:$0xff]
    %v34 = vld [vmem:[%s0 + $0x38] sm:$0xff]
    %v35 = vld [vmem:[%s0 + $0x40] sm:$0xff]
    %v36 = vld [vmem:[%s0 + $0x48] sm:$0xff]
    %v37 = vld [vmem:[%s0 + $0x50] sm:$0xff]
    %v38 = vld [vmem:[%s0 + $0x58] sm:$0xff]
    %v39 = vld [vmem:[%s0 + $0x60] sm:$0xff]
    %v40 = vld [vmem:[%s0 + $0x68] sm:$0xff]
    %v41 = vld [vmem:[%s0 + $0x70] sm:$0xff]
    %v42 = vld [vmem:[%s0 + $0x78] sm:$0xff]
    %v43 = vld [vmem:[%s1] sm:$0xff]
    %v44 = vld [vmem:[%s1 + $0x8] sm:$0xff]
    %v45 = vld [vmem:[%s1 + $0x10] sm:$0xff]
    %v46 = vld [vmem:[%s1 + $0x18] sm:$0xff]
    %v47 = vld [vmem:[%s1 + $0x20] sm:$0xff]
    %v48 = vld [vmem:[%s1 + $0x28] sm:$0xff]
    %v49 = vld [vmem:[%s1 + $0x30] sm:$0xff]
    %v50 = vld [vmem:[%s1 + $0x38] sm:$0xff]
    %v51 = vld [vmem:[%s1 + $0x40] sm:$0xff]
    %v52 = vld [vmem:[%s1 + $0x48] sm:$0xff]
    %v53 = vld [vmem:[%s1 + $0x50] sm:$0xff]
    %v54 = vld [vmem:[%s1 + $0x58] sm:$0xff]
    %v55 = vld [vmem:[%s1 + $0x60] sm:$0xff]
    %v56 = vld [vmem:[%s1 + $0x68] sm:$0xff]
    %v57 = vld [vmem:[%s1 + $0x70] sm:$0xff]
    %v58 = vld [vmem:[%s1 + $0x78] sm:$0xff]
    %v59 = vld [vmem:[%s2] sm:$0xff]
    %v60 = vld [vmem:[%s2 + $0x8] sm:$0xff]
    %v61 = vld [vmem:[%s2 + $0x10] sm:$0xff]
    %v62 = vld [vmem:[%s2 + $0x18] sm:$0xff]
    %v63 = vld [vmem:[%s2 + $0x20] sm:$0xff]
    %v64 = vld [vmem:[%s2 + $0x28] sm:$0xff]
    %v65 = vld [vmem:[%s2 + $0x30] sm:$0xff]
    %v66 = vld [vmem:[%s2 + $0x38] sm:$0xff]
    %v67 = vld [vmem:[%s2 + $0x40] sm:$0xff]
    %v68 = vld [vmem:[%s2 + $0x48] sm:$0xff]
    %v69 = vld [vmem:[%s2 + $0x50] sm:$0xff]
    %v70 = vld [vmem:[%s2 + $0x58] sm:$0xff]
    %v71 = vld [vmem:[%s2 + $0x60] sm:$0xff]
    %v72 = vld [vmem:[%s2 + $0x68] sm:$0xff]
    %v73 = vld [vmem:[%s2 + $0x70] sm:$0xff]
    %v74 = vld [vmem:[%s2 + $0x78] sm:$0xff]
    %v75 = vld [vmem:[%s3] sm:$0xf]
    %v76 = vld [vmem:[%s3 + $0x4] sm:$0xf]
    %v77 = vld [vmem:[%s3 + $0x8] sm:$0xf]
    %v78 = vld [vmem:[%s3 + $0xc] sm:$0xf]
    %v79 = vld [vmem:[%s3 + $0x10] sm:$0xf]
    %v80 = vld [vmem:[%s3 + $0x14] sm:$0xf]
    %v81 = vld [vmem:[%s3 + $0x18] sm:$0xf]
    %v82 = vld [vmem:[%s3 + $0x1c] sm:$0xf]
    %v83 = vld [vmem:[%s3 + $0x20] sm:$0xf]
    %v84 = vld [vmem:[%s3 + $0x24] sm:$0xf]
    %v85 = vld [vmem:[%s3 + $0x28] sm:$0xf]
    %v86 = vld [vmem:[%s3 + $0x2c] sm:$0xf]
    %v87 = vld [vmem:[%s3 + $0x30] sm:$0xf]
    %v88 = vld [vmem:[%s3 + $0x34] sm:$0xf]
    %v89 = vld [vmem:[%s3 + $0x38] sm:$0xf]
    %v90 = vld [vmem:[%s3 + $0x3c] sm:$0xf]
    %v91 = vld [vmem:[%s4] sm:$0xf]
    %v92 = vld [vmem:[%s4 + $0x8] sm:$0xf]
    %v93 = vld [vmem:[%s4 + $0x10] sm:$0xf]
    %v94 = vld [vmem:[%s4 + $0x18] sm:$0xf]
    %v95 = vld [vmem:[%s4 + $0x4] sm:$0xf]
    %v96 = vld [vmem:[%s4 + $0xc] sm:$0xf]
    %v97 = vld [vmem:[%s4 + $0x14] sm:$0xf]
    %v98 = vld [vmem:[%s4 + $0x1c] sm:$0xf]
    %v99 = vld [vmem:[%s5] sm:$0x1]
    %v100 = vld [vmem:[%s5] sm:$0x3]
    %v101 = vld [vmem:[%s5 + $0x1] sm:$0x1]
    %v102 = vpack.c.bf16 %v28, %v27
    %v103 = vpack.c.bf16 %v30, %v29
    %v104 = vpack.c.bf16 %v32, %v31
    %v105 = vpack.c.bf16 %v34, %v33
    %v106 = vpack.c.bf16 %v36, %v35
    %v107 = vpack.c.bf16 %v38, %v37
    %v108 = vpack.c.bf16 %v40, %v39
    %v109 = vpack.c.bf16 %v42, %v41
    %v110 = vpack.c.bf16 %v44, %v43
    %v111 = vpack.c.bf16 %v46, %v45
    %v112 = vpack.c.bf16 %v48, %v47
    %v113 = vpack.c.bf16 %v50, %v49
    %v114 = vpack.c.bf16 %v52, %v51
    %v115 = vpack.c.bf16 %v54, %v53
    %v116 = vpack.c.bf16 %v56, %v55
    %v117 = vpack.c.bf16 %v58, %v57
    %v134 = vunpack.c.l.b16 %v75
    %v135 = vunpack.c.l.b16 %v76
    %v136 = vunpack.c.l.b16 %v77
    %v137 = vunpack.c.l.b16 %v78
    %v138 = vunpack.c.l.b16 %v79
    %v139 = vunpack.c.l.b16 %v80
    %v140 = vunpack.c.l.b16 %v81
    %v141 = vunpack.c.l.b16 %v82
    %v142 = vunpack.c.l.b16 %v83
    %v143 = vunpack.c.l.b16 %v84
    %v144 = vunpack.c.l.b16 %v85
    %v145 = vunpack.c.l.b16 %v86
    %v146 = vunpack.c.l.b16 %v87
    %v147 = vunpack.c.l.b16 %v88
    %v148 = vunpack.c.l.b16 %v89
    %v149 = vunpack.c.l.b16 %v90
    %v150 = vpack.c.b16 %v135, %v134
    %v151 = vpack.c.b16 %v137, %v136
    %v152 = vpack.c.b16 %v139, %v138
    %v153 = vpack.c.b16 %v141, %v140
    %v154 = vpack.c.b16 %v143, %v142
    %v155 = vpack.c.b16 %v145, %v144
    %v156 = vpack.c.b16 %v147, %v146
    %v157 = vpack.c.b16 %v149, %v148
    %158 = vrot.lane.b32.xlu0 %v150, 104
    %v159 = vpop.permute.xlu0 %158
    %160 = vrot.lane.b32.xlu0 %v151, 104
    %v161 = vpop.permute.xlu0 %160
    %162 = vrot.lane.b32.xlu0 %v152, 104
    %v163 = vpop.permute.xlu0 %162
    %164 = vrot.lane.b32.xlu0 %v153, 104
    %v165 = vpop.permute.xlu0 %164
    %166 = vrot.lane.b32.xlu0 %v154, 104
    %v167 = vpop.permute.xlu0 %166
    %168 = vrot.lane.b32.xlu0 %v155, 104
    %v169 = vpop.permute.xlu0 %168
    %170 = vrot.lane.b32.xlu0 %v156, 104
    %v171 = vpop.permute.xlu0 %170
    %172 = vrot.lane.b32.xlu0 %v157, 104
    %v173 = vpop.permute.xlu0 %172
    %182 = vmatprep.subr.bf16.mxu0 0
    %183 = vmatpush1.bf16.msra.mxu0 %v173
    %184 = vmatprep.subr.bf16.mxu0 0
    %185 = vmatpush1.bf16.msra.mxu0 %v171
    %186 = vmatprep.subr.bf16.mxu0 0
    %187 = vmatpush1.bf16.msra.mxu0 %v169
    %188 = vmatprep.subr.bf16.mxu0 0
    %189 = vmatpush1.bf16.msra.mxu0 %v167
    %190 = vmatprep.subr.bf16.mxu0 0
    %191 = vmatpush1.bf16.msra.mxu0 %v165
    %192 = vmatprep.subr.bf16.mxu0 0
    %193 = vmatpush1.bf16.msra.mxu0 %v163
    %194 = vmatprep.subr.bf16.mxu0 0
    %195 = vmatpush1.bf16.msra.mxu0 %v161
    %196 = vmatprep.subr.bf16.mxu0 0
    %197 = vmatpush1.bf16.msra.mxu0 %v159
    %198 = vmatprep.subr.bf16.mxu0 0
    %199 = vmatpush2.bf16.msra.mxu0 0
    %200 = vmatprep.subr.bf16.mxu0 0
    %201 = vmatpush2.bf16.msra.mxu0 0
    %202 = vmatprep.subr.bf16.mxu0 0
    %203 = vmatpush2.bf16.msra.mxu0 0
    %204 = vmatprep.subr.bf16.mxu0 0
    %205 = vmatpush2.bf16.msra.mxu0 0
    %206 = vmatprep.subr.bf16.mxu0 0
    %207 = vmatpush2.bf16.msra.mxu0 0
    %208 = vmatprep.subr.bf16.mxu0 0
    %209 = vmatpush2.bf16.msra.mxu0 0
    %210 = vmatprep.subr.bf16.mxu0 0
    %211 = vmatpush2.bf16.msra.mxu0 0
    %212 = vmatprep.subr.bf16.mxu0 0
    %213 = vmatpush2.bf16.msra.mxu0 0
    %214 = vmatprep.mubr.bf16.mxu0 0
    %215 = vmatmul.mubr.bf16.gmra.mxu0 %v110
    %v216 = vpop.f32.mrf.mxu0
    %v217 = vadd.f32 0.0, %v216
    %v218 = vpop.f32.mrf.mxu0
    %v219 = vpop.f32.mrf.mxu0
    %v220 = vadd.f32 0.0, %v219
    %v221 = vpop.f32.mrf.mxu0
    %222 = vmatprep.mubr.bf16.mxu0 0
    %223 = vmatmul.mubr.bf16.gmra.mxu0 %v111
    %v224 = vpop.f32.mrf.mxu0
    %v225 = vadd.f32 0.0, %v224
    %v226 = vpop.f32.mrf.mxu0
    %v227 = vpop.f32.mrf.mxu0
    %v228 = vadd.f32 0.0, %v227
    %v229 = vpop.f32.mrf.mxu0
    %230 = vmatprep.mubr.bf16.mxu0 0
    %231 = vmatmul.mubr.bf16.gmra.mxu0 %v112
    %v232 = vpop.f32.mrf.mxu0
    %v233 = vadd.f32 0.0, %v232
    %v234 = vpop.f32.mrf.mxu0
    %v235 = vpop.f32.mrf.mxu0
    %v236 = vadd.f32 0.0, %v235
    %v237 = vpop.f32.mrf.mxu0
    %238 = vmatprep.mubr.bf16.mxu0 0
    %239 = vmatmul.mubr.bf16.gmra.mxu0 %v113
    %v240 = vpop.f32.mrf.mxu0
    %v241 = vadd.f32 0.0, %v240
    %v242 = vpop.f32.mrf.mxu0
    %v243 = vpop.f32.mrf.mxu0
    %v244 = vadd.f32 0.0, %v243
    %v245 = vpop.f32.mrf.mxu0
    %246 = vmatprep.mubr.bf16.mxu0 0
    %247 = vmatmul.mubr.bf16.gmra.mxu0 %v114
    %v248 = vpop.f32.mrf.mxu0
    %v249 = vadd.f32 0.0, %v248
    %v250 = vpop.f32.mrf.mxu0
    %v251 = vpop.f32.mrf.mxu0
    %v252 = vadd.f32 0.0, %v251
    %v253 = vpop.f32.mrf.mxu0
    %254 = vmatprep.mubr.bf16.mxu0 0
    %255 = vmatmul.mubr.bf16.gmra.mxu0 %v115
    %v256 = vpop.f32.mrf.mxu0
    %v257 = vadd.f32 0.0, %v256
    %v258 = vpop.f32.mrf.mxu0
    %v259 = vpop.f32.mrf.mxu0
    %v260 = vadd.f32 0.0, %v259
    %v261 = vpop.f32.mrf.mxu0
    %262 = vmatprep.mubr.bf16.mxu0 0
    %263 = vmatmul.mubr.bf16.gmra.mxu0 %v116
    %v264 = vpop.f32.mrf.mxu0
    %v265 = vadd.f32 0.0, %v264
    %v266 = vpop.f32.mrf.mxu0
    %v267 = vpop.f32.mrf.mxu0
    %v268 = vadd.f32 0.0, %v267
    %v269 = vpop.f32.mrf.mxu0
    %270 = vmatprep.mubr.bf16.mxu0 0
    %271 = vmatmul.mubr.bf16.gmra.mxu0 %v117
    %v272 = vpop.f32.mrf.mxu0
    %v273 = vadd.f32 0.0, %v272
    %v274 = vpop.f32.mrf.mxu0
    %v275 = vpop.f32.mrf.mxu0
    %v276 = vadd.f32 0.0, %v275
    %v277 = vpop.f32.mrf.mxu0
    %278 = vdwg.mxu0
    %279 = vrot.lane.b32.xlu0 %v150, 112
    %v280 = vpop.permute.xlu0 %279
    %281 = vrot.lane.b32.xlu0 %v151, 112
    %v282 = vpop.permute.xlu0 %281
    %283 = vrot.lane.b32.xlu0 %v152, 112
    %v284 = vpop.permute.xlu0 %283
    %285 = vrot.lane.b32.xlu0 %v153, 112
    %v286 = vpop.permute.xlu0 %285
    %287 = vrot.lane.b32.xlu0 %v154, 112
    %v288 = vpop.permute.xlu0 %287
    %289 = vrot.lane.b32.xlu0 %v155, 112
    %v290 = vpop.permute.xlu0 %289
    %291 = vrot.lane.b32.xlu0 %v156, 112
    %v292 = vpop.permute.xlu0 %291
    %293 = vrot.lane.b32.xlu0 %v157, 112
    %v294 = vpop.permute.xlu0 %293
    %303 = vmatprep.subr.bf16.mxu0 0
    %304 = vmatpush1.bf16.msra.mxu0 %v294
    %305 = vmatprep.subr.bf16.mxu0 0
    %306 = vmatpush1.bf16.msra.mxu0 %v292
    %307 = vmatprep.subr.bf16.mxu0 0
    %308 = vmatpush1.bf16.msra.mxu0 %v290
    %309 = vmatprep.subr.bf16.mxu0 0
    %310 = vmatpush1.bf16.msra.mxu0 %v288
    %311 = vmatprep.subr.bf16.mxu0 0
    %312 = vmatpush1.bf16.msra.mxu0 %v286
    %313 = vmatprep.subr.bf16.mxu0 0
    %314 = vmatpush1.bf16.msra.mxu0 %v284
    %315 = vmatprep.subr.bf16.mxu0 0
    %316 = vmatpush1.bf16.msra.mxu0 %v282
    %317 = vmatprep.subr.bf16.mxu0 0
    %318 = vmatpush1.bf16.msra.mxu0 %v280
    %319 = vmatprep.subr.bf16.mxu0 0
    %320 = vmatpush2.bf16.msra.mxu0 0
    %321 = vmatprep.subr.bf16.mxu0 0
    %322 = vmatpush2.bf16.msra.mxu0 0
    %323 = vmatprep.subr.bf16.mxu0 0
    %324 = vmatpush2.bf16.msra.mxu0 0
    %325 = vmatprep.subr.bf16.mxu0 0
    %326 = vmatpush2.bf16.msra.mxu0 0
    %327 = vmatprep.subr.bf16.mxu0 0
    %328 = vmatpush2.bf16.msra.mxu0 0
    %329 = vmatprep.subr.bf16.mxu0 0
    %330 = vmatpush2.bf16.msra.mxu0 0
    %331 = vmatprep.subr.bf16.mxu0 0
    %332 = vmatpush2.bf16.msra.mxu0 0
    %333 = vmatprep.subr.bf16.mxu0 0
    %334 = vmatpush2.bf16.msra.mxu0 0
    %335 = vmatprep.mubr.bf16.mxu0 0
    %336 = vmatmul.mubr.bf16.gmra.mxu0 %v102
    %v337 = vpop.f32.mrf.mxu0
    %v338 = vadd.f32 %v217, %v337
    %v339 = vpop.f32.mrf.mxu0
    %v340 = vpop.f32.mrf.mxu0
    %v341 = vadd.f32 %v220, %v340
    %v342 = vpop.f32.mrf.mxu0
    %343 = vmatprep.mubr.bf16.mxu0 0
    %344 = vmatmul.mubr.bf16.gmra.mxu0 %v103
    %v345 = vpop.f32.mrf.mxu0
    %v346 = vadd.f32 %v225, %v345
    %v347 = vpop.f32.mrf.mxu0
    %v348 = vpop.f32.mrf.mxu0
    %v349 = vadd.f32 %v228, %v348
    %v350 = vpop.f32.mrf.mxu0
    %351 = vmatprep.mubr.bf16.mxu0 0
    %352 = vmatmul.mubr.bf16.gmra.mxu0 %v104
    %v353 = vpop.f32.mrf.mxu0
    %v354 = vadd.f32 %v233, %v353
    %v355 = vpop.f32.mrf.mxu0
    %v356 = vpop.f32.mrf.mxu0
    %v357 = vadd.f32 %v236, %v356
    %v358 = vpop.f32.mrf.mxu0
    %359 = vmatprep.mubr.bf16.mxu0 0
    %360 = vmatmul.mubr.bf16.gmra.mxu0 %v105
    %v361 = vpop.f32.mrf.mxu0
    %v362 = vadd.f32 %v241, %v361
    %v363 = vpop.f32.mrf.mxu0
    %v364 = vpop.f32.mrf.mxu0
    %v365 = vadd.f32 %v244, %v364
    %v366 = vpop.f32.mrf.mxu0
    %367 = vmatprep.mubr.bf16.mxu0 0
    %368 = vmatmul.mubr.bf16.gmra.mxu0 %v106
    %v369 = vpop.f32.mrf.mxu0
    %v370 = vadd.f32 %v249, %v369
    %v371 = vpop.f32.mrf.mxu0
    %v372 = vpop.f32.mrf.mxu0
    %v373 = vadd.f32 %v252, %v372
    %v374 = vpop.f32.mrf.mxu0
    %375 = vmatprep.mubr.bf16.mxu0 0
    %376 = vmatmul.mubr.bf16.gmra.mxu0 %v107
    %v377 = vpop.f32.mrf.mxu0
    %v378 = vadd.f32 %v257, %v377
    %v379 = vpop.f32.mrf.mxu0
    %v380 = vpop.f32.mrf.mxu0
    %v381 = vadd.f32 %v260, %v380
    %v382 = vpop.f32.mrf.mxu0
    %383 = vmatprep.mubr.bf16.mxu0 0
    %384 = vmatmul.mubr.bf16.gmra.mxu0 %v108
    %v385 = vpop.f32.mrf.mxu0
    %v386 = vadd.f32 %v265, %v385
    %v387 = vpop.f32.mrf.mxu0
    %v388 = vpop.f32.mrf.mxu0
    %v389 = vadd.f32 %v268, %v388
    %v390 = vpop.f32.mrf.mxu0
    %391 = vmatprep.mubr.bf16.mxu0 0
    %392 = vmatmul.mubr.bf16.gmra.mxu0 %v109
    %v393 = vpop.f32.mrf.mxu0
    %v394 = vadd.f32 %v273, %v393
    %v395 = vpop.f32.mrf.mxu0
    %v396 = vpop.f32.mrf.mxu0
    %v397 = vadd.f32 %v276, %v396
    %v398 = vpop.f32.mrf.mxu0
    %399 = vdwg.mxu0
    %v400 = vpack.c.bf16 %v60, %v59
    %v401 = vpack.c.bf16 %v62, %v61
    %v402 = vpack.c.bf16 %v64, %v63
    %v403 = vpack.c.bf16 %v66, %v65
    %v404 = vpack.c.bf16 %v68, %v67
    %v405 = vpack.c.bf16 %v70, %v69
    %v406 = vpack.c.bf16 %v72, %v71
    %v407 = vpack.c.bf16 %v74, %v73
    %408 = vrot.lane.b32.xlu0 %v150, 96
    %v409 = vpop.permute.xlu0 %408
    %410 = vrot.lane.b32.xlu0 %v151, 96
    %v411 = vpop.permute.xlu0 %410
    %412 = vrot.lane.b32.xlu0 %v152, 96
    %v413 = vpop.permute.xlu0 %412
    %414 = vrot.lane.b32.xlu0 %v153, 96
    %v415 = vpop.permute.xlu0 %414
    %416 = vrot.lane.b32.xlu0 %v154, 96
    %v417 = vpop.permute.xlu0 %416
    %418 = vrot.lane.b32.xlu0 %v155, 96
    %v419 = vpop.permute.xlu0 %418
    %420 = vrot.lane.b32.xlu0 %v156, 96
    %v421 = vpop.permute.xlu0 %420
    %422 = vrot.lane.b32.xlu0 %v157, 96
    %v423 = vpop.permute.xlu0 %422
    %432 = vmatprep.subr.bf16.mxu0 0
    %433 = vmatpush1.bf16.msra.mxu0 %v423
    %434 = vmatprep.subr.bf16.mxu0 0
    %435 = vmatpush1.bf16.msra.mxu0 %v421
    %436 = vmatprep.subr.bf16.mxu0 0
    %437 = vmatpush1.bf16.msra.mxu0 %v419
    %438 = vmatprep.subr.bf16.mxu0 0
    %439 = vmatpush1.bf16.msra.mxu0 %v417
    %440 = vmatprep.subr.bf16.mxu0 0
    %441 = vmatpush1.bf16.msra.mxu0 %v415
    %442 = vmatprep.subr.bf16.mxu0 0
    %443 = vmatpush1.bf16.msra.mxu0 %v413
    %444 = vmatprep.subr.bf16.mxu0 0
    %445 = vmatpush1.bf16.msra.mxu0 %v411
    %446 = vmatprep.subr.bf16.mxu0 0
    %447 = vmatpush1.bf16.msra.mxu0 %v409
    %448 = vmatprep.subr.bf16.mxu0 0
    %449 = vmatpush2.bf16.msra.mxu0 0
    %450 = vmatprep.subr.bf16.mxu0 0
    %451 = vmatpush2.bf16.msra.mxu0 0
    %452 = vmatprep.subr.bf16.mxu0 0
    %453 = vmatpush2.bf16.msra.mxu0 0
    %454 = vmatprep.subr.bf16.mxu0 0
    %455 = vmatpush2.bf16.msra.mxu0 0
    %456 = vmatprep.subr.bf16.mxu0 0
    %457 = vmatpush2.bf16.msra.mxu0 0
    %458 = vmatprep.subr.bf16.mxu0 0
    %459 = vmatpush2.bf16.msra.mxu0 0
    %460 = vmatprep.subr.bf16.mxu0 0
    %461 = vmatpush2.bf16.msra.mxu0 0
    %462 = vmatprep.subr.bf16.mxu0 0
    %463 = vmatpush2.bf16.msra.mxu0 0
    %464 = vmatprep.mubr.bf16.mxu0 0
    %465 = vmatmul.mubr.bf16.gmra.mxu0 %v400
    %v466 = vpop.f32.mrf.mxu0
    %v467 = vadd.f32 0.0, %v466
    %v468 = vpop.f32.mrf.mxu0
    %v469 = vpop.f32.mrf.mxu0
    %v470 = vadd.f32 0.0, %v469
    %v471 = vpop.f32.mrf.mxu0
    %472 = vmatprep.mubr.bf16.mxu0 0
    %473 = vmatmul.mubr.bf16.gmra.mxu0 %v401
    %v474 = vpop.f32.mrf.mxu0
    %v475 = vadd.f32 0.0, %v474
    %v476 = vpop.f32.mrf.mxu0
    %v477 = vpop.f32.mrf.mxu0
    %v478 = vadd.f32 0.0, %v477
    %v479 = vpop.f32.mrf.mxu0
    %480 = vmatprep.mubr.bf16.mxu0 0
    %481 = vmatmul.mubr.bf16.gmra.mxu0 %v402
    %v482 = vpop.f32.mrf.mxu0
    %v483 = vadd.f32 0.0, %v482
    %v484 = vpop.f32.mrf.mxu0
    %v485 = vpop.f32.mrf.mxu0
    %v486 = vadd.f32 0.0, %v485
    %v487 = vpop.f32.mrf.mxu0
    %488 = vmatprep.mubr.bf16.mxu0 0
    %489 = vmatmul.mubr.bf16.gmra.mxu0 %v403
    %v490 = vpop.f32.mrf.mxu0
    %v491 = vadd.f32 0.0, %v490
    %v492 = vpop.f32.mrf.mxu0
    %v493 = vpop.f32.mrf.mxu0
    %v494 = vadd.f32 0.0, %v493
    %v495 = vpop.f32.mrf.mxu0
    %496 = vmatprep.mubr.bf16.mxu0 0
    %497 = vmatmul.mubr.bf16.gmra.mxu0 %v404
    %v498 = vpop.f32.mrf.mxu0
    %v499 = vadd.f32 0.0, %v498
    %v500 = vpop.f32.mrf.mxu0
    %v501 = vpop.f32.mrf.mxu0
    %v502 = vadd.f32 0.0, %v501
    %v503 = vpop.f32.mrf.mxu0
    %504 = vmatprep.mubr.bf16.mxu0 0
    %505 = vmatmul.mubr.bf16.gmra.mxu0 %v405
    %v506 = vpop.f32.mrf.mxu0
    %v507 = vadd.f32 0.0, %v506
    %v508 = vpop.f32.mrf.mxu0
    %v509 = vpop.f32.mrf.mxu0
    %v510 = vadd.f32 0.0, %v509
    %v511 = vpop.f32.mrf.mxu0
    %512 = vmatprep.mubr.bf16.mxu0 0
    %513 = vmatmul.mubr.bf16.gmra.mxu0 %v406
    %v514 = vpop.f32.mrf.mxu0
    %v515 = vadd.f32 0.0, %v514
    %v516 = vpop.f32.mrf.mxu0
    %v517 = vpop.f32.mrf.mxu0
    %v518 = vadd.f32 0.0, %v517
    %v519 = vpop.f32.mrf.mxu0
    %520 = vmatprep.mubr.bf16.mxu0 0
    %521 = vmatmul.mubr.bf16.gmra.mxu0 %v407
    %v522 = vpop.f32.mrf.mxu0
    %v523 = vadd.f32 0.0, %v522
    %v524 = vpop.f32.mrf.mxu0
    %v525 = vpop.f32.mrf.mxu0
    %v526 = vadd.f32 0.0, %v525
    %v527 = vpop.f32.mrf.mxu0
    %528 = vdwg.mxu0
    %v529 = vadd.f32 %v338, %v467
    %v530 = vadd.f32 %v341, %v470
    %v531 = vadd.f32 %v346, %v475
    %v532 = vadd.f32 %v349, %v478
    %v533 = vadd.f32 %v354, %v483
    %v534 = vadd.f32 %v357, %v486
    %v535 = vadd.f32 %v362, %v491
    %v536 = vadd.f32 %v365, %v494
    %v537 = vadd.f32 %v370, %v499
    %v538 = vadd.f32 %v373, %v502
    %v539 = vadd.f32 %v378, %v507
    %v540 = vadd.f32 %v381, %v510
    %v541 = vadd.f32 %v386, %v515
    %v542 = vadd.f32 %v389, %v518
    %v543 = vadd.f32 %v394, %v523
    %v544 = vadd.f32 %v397, %v526
    %v546 = vlaneseq
    %v547 = vshrl.u32 %v546, 7
    %v548 = vsub.s32 0, %v547
    %v549 = vrot.slane %v99, %v548
    %v551 = vadd.f32 %v529, %v549
    %v552 = vadd.f32 %v530, %v549
    %v553 = vadd.f32 %v531, %v549
    %v554 = vadd.f32 %v532, %v549
    %v555 = vadd.f32 %v533, %v549
    %v556 = vadd.f32 %v534, %v549
    %v557 = vadd.f32 %v535, %v549
    %v558 = vadd.f32 %v536, %v549
    %v559 = vadd.f32 %v537, %v549
    %v560 = vadd.f32 %v538, %v549
    %v561 = vadd.f32 %v539, %v549
    %v562 = vadd.f32 %v540, %v549
    %v563 = vadd.f32 %v541, %v549
    %v564 = vadd.f32 %v542, %v549
    %v565 = vadd.f32 %v543, %v549
    %v566 = vadd.f32 %v544, %v549
    %567 = vxpose.xlu0.b32.start [1/16] %v551, 128
    %568 = vxpose.xlu0.b32.cont [2/16] %v552, 128
    %569 = vxpose.xlu0.b32.cont [3/16] %v553, 128
    %570 = vxpose.xlu0.b32.cont [4/16] %v554, 128
    %571 = vxpose.xlu0.b32.cont [5/16] %v555, 128
    %572 = vxpose.xlu0.b32.cont [6/16] %v556, 128
    %573 = vxpose.xlu0.b32.cont [7/16] %v557, 128
    %574 = vxpose.xlu0.b32.cont [8/16] %v558, 128
    %575 = vxpose.xlu0.b32.cont [9/16] %v559, 128
    %576 = vxpose.xlu0.b32.cont [10/16] %v560, 128
    %577 = vxpose.xlu0.b32.cont [11/16] %v561, 128
    %578 = vxpose.xlu0.b32.cont [12/16] %v562, 128
    %579 = vxpose.xlu0.b32.cont [13/16] %v563, 128
    %580 = vxpose.xlu0.b32.cont [14/16] %v564, 128
    %581 = vxpose.xlu0.b32.cont [15/16] %v565, 128
    %582 = vxpose.xlu0.b32.end [16/16] %v566, 128
    %v583 = vpop.trf.xlu0
    %v584 = vpop.trf.xlu0
    %v585 = vpop.trf.xlu0
    %v586 = vpop.trf.xlu0
    %v587 = vpop.trf.xlu0
    %v588 = vpop.trf.xlu0
    %v589 = vpop.trf.xlu0
    %v590 = vpop.trf.xlu0
    %v591 = vpop.trf.xlu0
    %v592 = vpop.trf.xlu0
    %v593 = vpop.trf.xlu0
    %v594 = vpop.trf.xlu0
    %v595 = vpop.trf.xlu0
    %v596 = vpop.trf.xlu0
    %v597 = vpop.trf.xlu0
    %v598 = vpop.trf.xlu0
    %vm599 = vcmask 1042432
    %v600 = vsel %vm599, %v583, -inf
    %v601 = vrot.slane %v600, 4
    %v602 = vmax.f32 %v600, %v601
    %v603 = vrot.slane %v602, 2
    %v604 = vmax.f32 %v602, %v603
    %v605 = vrot.slane %v604, 1
    %v606 = vmax.f32 %v604, %v605
    %v607 = vsub.f32 %v583, %v606
    %v608 = vmul.f32 %v607, 1.442695
    %v609 = vpow.pop %v608
    %v610 = vsel %vm599, %v609, 0.0
    %v611 = vrot.slane %v610, 4
    %v612 = vadd.f32 %v610, %v611
    %v613 = vrot.slane %v612, 2
    %v614 = vadd.f32 %v612, %v613
    %v615 = vrot.slane %v614, 1
    %v616 = vadd.f32 %v614, %v615
    %v617 = vrcp.pop %v616
    %v618 = vmul.f32 %v609, %v617
    %619 = vst [vmem:[#allocation2] sm:$0x7] %v618
    %v620 = vlaneseq
    %v621 = vshrl.u32 %v620, 7
    %v622 = vsub.s32 0, %v621
    %v623 = vrot.slane %v618, %v622
    %v624 = vmul.f32 %v623, %v27
    %v625 = vmul.f32 %v623, %v28
    %v626 = vmul.f32 %v623, %v29
    %v627 = vmul.f32 %v623, %v30
    %v628 = vmul.f32 %v623, %v31
    %v629 = vmul.f32 %v623, %v32
    %v630 = vmul.f32 %v623, %v33
    %v631 = vmul.f32 %v623, %v34
    %v632 = vmul.f32 %v623, %v35
    %v633 = vmul.f32 %v623, %v36
    %v634 = vmul.f32 %v623, %v37
    %v635 = vmul.f32 %v623, %v38
    %v636 = vmul.f32 %v623, %v39
    %v637 = vmul.f32 %v623, %v40
    %v638 = vmul.f32 %v623, %v41
    %v639 = vmul.f32 %v623, %v42
    %v640 = vlaneseq
    %v641 = vshrl.u32 %v640, 7
    %v642 = vsub.s32 1, %v641
    %v643 = vrot.slane %v618, %v642
    %v644 = vmul.f32 %v643, %v43
    %v645 = vmul.f32 %v643, %v44
    %v646 = vmul.f32 %v643, %v45
    %v647 = vmul.f32 %v643, %v46
    %v648 = vmul.f32 %v643, %v47
    %v649 = vmul.f32 %v643, %v48
    %v650 = vmul.f32 %v643, %v49
    %v651 = vmul.f32 %v643, %v50
    %v652 = vmul.f32 %v643, %v51
    %v653 = vmul.f32 %v643, %v52
    %v654 = vmul.f32 %v643, %v53
    %v655 = vmul.f32 %v643, %v54
    %v656 = vmul.f32 %v643, %v55
    %v657 = vmul.f32 %v643, %v56
    %v658 = vmul.f32 %v643, %v57
    %v659 = vmul.f32 %v643, %v58
    %v660 = vadd.f32 %v624, %v644
    %v661 = vadd.f32 %v625, %v645
    %v662 = vadd.f32 %v626, %v646
    %v663 = vadd.f32 %v627, %v647
    %v664 = vadd.f32 %v628, %v648
    %v665 = vadd.f32 %v629, %v649
    %v666 = vadd.f32 %v630, %v650
    %v667 = vadd.f32 %v631, %v651
    %v668 = vadd.f32 %v632, %v652
    %v669 = vadd.f32 %v633, %v653
    %v670 = vadd.f32 %v634, %v654
    %v671 = vadd.f32 %v635, %v655
    %v672 = vadd.f32 %v636, %v656
    %v673 = vadd.f32 %v637, %v657
    %v674 = vadd.f32 %v638, %v658
    %v675 = vadd.f32 %v639, %v659
    %v676 = vlaneseq
    %v677 = vshrl.u32 %v676, 7
    %v678 = vsub.s32 2, %v677
    %v679 = vrot.slane %v618, %v678
    %v680 = vmul.f32 %v679, %v59
    %v681 = vmul.f32 %v679, %v60
    %v682 = vmul.f32 %v679, %v61
    %v683 = vmul.f32 %v679, %v62
    %v684 = vmul.f32 %v679, %v63
    %v685 = vmul.f32 %v679, %v64
    %v686 = vmul.f32 %v679, %v65
    %v687 = vmul.f32 %v679, %v66
    %v688 = vmul.f32 %v679, %v67
    %v689 = vmul.f32 %v679, %v68
    %v690 = vmul.f32 %v679, %v69
    %v691 = vmul.f32 %v679, %v70
    %v692 = vmul.f32 %v679, %v71
    %v693 = vmul.f32 %v679, %v72
    %v694 = vmul.f32 %v679, %v73
    %v695 = vmul.f32 %v679, %v74
    %v696 = vadd.f32 %v660, %v680
    %v697 = vadd.f32 %v661, %v681
    %v698 = vadd.f32 %v662, %v682
    %v699 = vadd.f32 %v663, %v683
    %v700 = vadd.f32 %v664, %v684
    %v701 = vadd.f32 %v665, %v685
    %v702 = vadd.f32 %v666, %v686
    %v703 = vadd.f32 %v667, %v687
    %v704 = vadd.f32 %v668, %v688
    %v705 = vadd.f32 %v669, %v689
    %v706 = vadd.f32 %v670, %v690
    %v707 = vadd.f32 %v671, %v691
    %v708 = vadd.f32 %v672, %v692
    %v709 = vadd.f32 %v673, %v693
    %v710 = vadd.f32 %v674, %v694
    %v711 = vadd.f32 %v675, %v695
    %v714 = vunpack.c.l.b16 %v91
    %v715 = vunpack.c.l.b16 %v92
    %v716 = vpack.c.b16 %v715, %v714
    %vm718 = vcmask 130048
    %v720 = vsel %vm718, %v150, 0
    %v723 = vsel %vm718, %v151, 0
    %v726 = vsel %vm718, %v152, 0
    %v729 = vsel %vm718, %v153, 0
    %v732 = vsel %vm718, %v154, 0
    %v735 = vsel %vm718, %v155, 0
    %v738 = vsel %vm718, %v156, 0
    %v741 = vsel %vm718, %v157, 0
    %743 = vmatprep.subr.bf16.mxu0 0
    %744 = vmatpush1.bf16.msra.mxu0 0
    %745 = vmatprep.subr.bf16.mxu0 0
    %746 = vmatpush1.bf16.msra.mxu0 0
    %747 = vmatprep.subr.bf16.mxu0 0
    %748 = vmatpush1.bf16.msra.mxu0 0
    %749 = vmatprep.subr.bf16.mxu0 0
    %750 = vmatpush1.bf16.msra.mxu0 0
    %751 = vmatprep.subr.bf16.mxu0 0
    %752 = vmatpush1.bf16.msra.mxu0 0
    %753 = vmatprep.subr.bf16.mxu0 0
    %754 = vmatpush1.bf16.msra.mxu0 0
    %755 = vmatprep.subr.bf16.mxu0 0
    %756 = vmatpush1.bf16.msra.mxu0 0
    %757 = vmatprep.subr.bf16.mxu0 0
    %758 = vmatpush1.bf16.msra.mxu0 %v716
    %759 = vmatprep.subr.bf16.mxu0 0
    %760 = vmatpush2.bf16.msra.mxu0 0
    %761 = vmatprep.subr.bf16.mxu0 0
    %762 = vmatpush2.bf16.msra.mxu0 0
    %763 = vmatprep.subr.bf16.mxu0 0
    %764 = vmatpush2.bf16.msra.mxu0 0
    %765 = vmatprep.subr.bf16.mxu0 0
    %766 = vmatpush2.bf16.msra.mxu0 0
    %767 = vmatprep.subr.bf16.mxu0 0
    %768 = vmatpush2.bf16.msra.mxu0 0
    %769 = vmatprep.subr.bf16.mxu0 0
    %770 = vmatpush2.bf16.msra.mxu0 0
    %771 = vmatprep.subr.bf16.mxu0 0
    %772 = vmatpush2.bf16.msra.mxu0 0
    %773 = vmatprep.subr.bf16.mxu0 0
    %774 = vmatpush2.bf16.msra.mxu0 0
    %775 = vmatprep.mubr.bf16.mxu0 0
    %776 = vmatmul.mubr.bf16.gmra.mxu0 %v720
    %v777 = vpop.f32.mrf.mxu0
    %v778 = vadd.f32 0.0, %v777
    %v779 = vpop.f32.mrf.mxu0
    %v780 = vpop.f32.mrf.mxu0
    %v781 = vadd.f32 0.0, %v780
    %v782 = vpop.f32.mrf.mxu0
    %783 = vmatprep.mubr.bf16.mxu0 0
    %784 = vmatmul.mubr.bf16.gmra.mxu0 %v723
    %v785 = vpop.f32.mrf.mxu0
    %v786 = vadd.f32 0.0, %v785
    %v787 = vpop.f32.mrf.mxu0
    %v788 = vpop.f32.mrf.mxu0
    %v789 = vadd.f32 0.0, %v788
    %v790 = vpop.f32.mrf.mxu0
    %791 = vmatprep.mubr.bf16.mxu0 0
    %792 = vmatmul.mubr.bf16.gmra.mxu0 %v726
    %v793 = vpop.f32.mrf.mxu0
    %v794 = vadd.f32 0.0, %v793
    %v795 = vpop.f32.mrf.mxu0
    %v796 = vpop.f32.mrf.mxu0
    %v797 = vadd.f32 0.0, %v796
    %v798 = vpop.f32.mrf.mxu0
    %799 = vmatprep.mubr.bf16.mxu0 0
    %800 = vmatmul.mubr.bf16.gmra.mxu0 %v729
    %v801 = vpop.f32.mrf.mxu0
    %v802 = vadd.f32 0.0, %v801
    %v803 = vpop.f32.mrf.mxu0
    %v804 = vpop.f32.mrf.mxu0
    %v805 = vadd.f32 0.0, %v804
    %v806 = vpop.f32.mrf.mxu0
    %807 = vmatprep.mubr.bf16.mxu0 0
    %808 = vmatmul.mubr.bf16.gmra.mxu0 %v732
    %v809 = vpop.f32.mrf.mxu0
    %v810 = vadd.f32 0.0, %v809
    %v811 = vpop.f32.mrf.mxu0
    %v812 = vpop.f32.mrf.mxu0
    %v813 = vadd.f32 0.0, %v812
    %v814 = vpop.f32.mrf.mxu0
    %815 = vmatprep.mubr.bf16.mxu0 0
    %816 = vmatmul.mubr.bf16.gmra.mxu0 %v735
    %v817 = vpop.f32.mrf.mxu0
    %v818 = vadd.f32 0.0, %v817
    %v819 = vpop.f32.mrf.mxu0
    %v820 = vpop.f32.mrf.mxu0
    %v821 = vadd.f32 0.0, %v820
    %v822 = vpop.f32.mrf.mxu0
    %823 = vmatprep.mubr.bf16.mxu0 0
    %824 = vmatmul.mubr.bf16.gmra.mxu0 %v738
    %v825 = vpop.f32.mrf.mxu0
    %v826 = vadd.f32 0.0, %v825
    %v827 = vpop.f32.mrf.mxu0
    %v828 = vpop.f32.mrf.mxu0
    %v829 = vadd.f32 0.0, %v828
    %v830 = vpop.f32.mrf.mxu0
    %831 = vmatprep.mubr.bf16.mxu0 0
    %832 = vmatmul.mubr.bf16.gmra.mxu0 %v741
    %v833 = vpop.f32.mrf.mxu0
    %v834 = vadd.f32 0.0, %v833
    %v835 = vpop.f32.mrf.mxu0
    %v836 = vpop.f32.mrf.mxu0
    %v837 = vadd.f32 0.0, %v836
    %v838 = vpop.f32.mrf.mxu0
    %839 = vdwg.mxu0
    %v840 = vpack.c.bf16 %v697, %v696
    %v841 = vpack.c.bf16 %v699, %v698
    %v842 = vpack.c.bf16 %v701, %v700
    %v843 = vpack.c.bf16 %v703, %v702
    %v844 = vpack.c.bf16 %v705, %v704
    %v845 = vpack.c.bf16 %v707, %v706
    %v846 = vpack.c.bf16 %v709, %v708
    %v847 = vpack.c.bf16 %v711, %v710
    %v848 = vpack.c.bf16 %v781, %v778
    %v849 = vpack.c.bf16 %v789, %v786
    %v850 = vpack.c.bf16 %v797, %v794
    %v851 = vpack.c.bf16 %v805, %v802
    %v852 = vpack.c.bf16 %v813, %v810
    %v853 = vpack.c.bf16 %v821, %v818
    %v854 = vpack.c.bf16 %v829, %v826
    %v855 = vpack.c.bf16 %v837, %v834
    %856 = vrot.lane.b32.xlu0 %v549, 120
    %v857 = vpop.permute.xlu0 %856
    %859 = vmatprep.subr.bf16.mxu0 0
    %860 = vmatpush1.bf16.msra.mxu0 %v855
    %861 = vmatprep.subr.bf16.mxu0 0
    %862 = vmatpush1.bf16.msra.mxu0 %v854
    %863 = vmatprep.subr.bf16.mxu0 0
    %864 = vmatpush1.bf16.msra.mxu0 %v853
    %865 = vmatprep.subr.bf16.mxu0 0
    %866 = vmatpush1.bf16.msra.mxu0 %v852
    %867 = vmatprep.subr.bf16.mxu0 0
    %868 = vmatpush1.bf16.msra.mxu0 %v851
    %869 = vmatprep.subr.bf16.mxu0 0
    %870 = vmatpush1.bf16.msra.mxu0 %v850
    %871 = vmatprep.subr.bf16.mxu0 0
    %872 = vmatpush1.bf16.msra.mxu0 %v849
    %873 = vmatprep.subr.bf16.mxu0 0
    %874 = vmatpush1.bf16.msra.mxu0 %v848
    %875 = vmatprep.subr.bf16.mxu0 0
    %876 = vmatpush2.bf16.msra.mxu0 0
    %877 = vmatprep.subr.bf16.mxu0 0
    %878 = vmatpush2.bf16.msra.mxu0 0
    %879 = vmatprep.subr.bf16.mxu0 0
    %880 = vmatpush2.bf16.msra.mxu0 0
    %881 = vmatprep.subr.bf16.mxu0 0
    %882 = vmatpush2.bf16.msra.mxu0 0
    %883 = vmatprep.subr.bf16.mxu0 0
    %884 = vmatpush2.bf16.msra.mxu0 0
    %885 = vmatprep.subr.bf16.mxu0 0
    %886 = vmatpush2.bf16.msra.mxu0 0
    %887 = vmatprep.subr.bf16.mxu0 0
    %888 = vmatpush2.bf16.msra.mxu0 0
    %889 = vmatprep.subr.bf16.mxu0 0
    %890 = vmatpush2.bf16.msra.mxu0 0
    %891 = vmatprep.mubr.bf16.mxu0 0
    %892 = vmatmul.mubr.bf16.gmra.mxu0 %v840
    %v893 = vpop.f32.mrf.mxu0
    %v894 = vadd.f32 %v857, %v893
    %v895 = vpop.f32.mrf.mxu0
    %v896 = vpop.f32.mrf.mxu0
    %v897 = vadd.f32 %v857, %v896
    %v898 = vpop.f32.mrf.mxu0
    %899 = vmatprep.mubr.bf16.mxu0 0
    %900 = vmatmul.mubr.bf16.gmra.mxu0 %v841
    %v901 = vpop.f32.mrf.mxu0
    %v902 = vadd.f32 %v857, %v901
    %v903 = vpop.f32.mrf.mxu0
    %v904 = vpop.f32.mrf.mxu0
    %v905 = vadd.f32 %v857, %v904
    %v906 = vpop.f32.mrf.mxu0
    %907 = vmatprep.mubr.bf16.mxu0 0
    %908 = vmatmul.mubr.bf16.gmra.mxu0 %v842
    %v909 = vpop.f32.mrf.mxu0
    %v910 = vadd.f32 %v857, %v909
    %v911 = vpop.f32.mrf.mxu0
    %v912 = vpop.f32.mrf.mxu0
    %v913 = vadd.f32 %v857, %v912
    %v914 = vpop.f32.mrf.mxu0
    %915 = vmatprep.mubr.bf16.mxu0 0
    %916 = vmatmul.mubr.bf16.gmra.mxu0 %v843
    %v917 = vpop.f32.mrf.mxu0
    %v918 = vadd.f32 %v857, %v917
    %v919 = vpop.f32.mrf.mxu0
    %v920 = vpop.f32.mrf.mxu0
    %v921 = vadd.f32 %v857, %v920
    %v922 = vpop.f32.mrf.mxu0
    %923 = vmatprep.mubr.bf16.mxu0 0
    %924 = vmatmul.mubr.bf16.gmra.mxu0 %v844
    %v925 = vpop.f32.mrf.mxu0
    %v926 = vadd.f32 %v857, %v925
    %v927 = vpop.f32.mrf.mxu0
    %v928 = vpop.f32.mrf.mxu0
    %v929 = vadd.f32 %v857, %v928
    %v930 = vpop.f32.mrf.mxu0
    %931 = vmatprep.mubr.bf16.mxu0 0
    %932 = vmatmul.mubr.bf16.gmra.mxu0 %v845
    %v933 = vpop.f32.mrf.mxu0
    %v934 = vadd.f32 %v857, %v933
    %v935 = vpop.f32.mrf.mxu0
    %v936 = vpop.f32.mrf.mxu0
    %v937 = vadd.f32 %v857, %v936
    %v938 = vpop.f32.mrf.mxu0
    %939 = vmatprep.mubr.bf16.mxu0 0
    %940 = vmatmul.mubr.bf16.gmra.mxu0 %v846
    %v941 = vpop.f32.mrf.mxu0
    %v942 = vadd.f32 %v857, %v941
    %v943 = vpop.f32.mrf.mxu0
    %v944 = vpop.f32.mrf.mxu0
    %v945 = vadd.f32 %v857, %v944
    %v946 = vpop.f32.mrf.mxu0
    %947 = vmatprep.mubr.bf16.mxu0 0
    %948 = vmatmul.mubr.bf16.gmra.mxu0 %v847
    %v949 = vpop.f32.mrf.mxu0
    %v950 = vadd.f32 %v857, %v949
    %v951 = vpop.f32.mrf.mxu0
    %v952 = vpop.f32.mrf.mxu0
    %v953 = vadd.f32 %v857, %v952
    %v954 = vpop.f32.mrf.mxu0
    %955 = vdwg.mxu0
    %v956 = vmax.f32 %v894, 0.0
    %v957 = vmax.f32 %v897, 0.0
    %v958 = vmax.f32 %v902, 0.0
    %v959 = vmax.f32 %v905, 0.0
    %v960 = vmax.f32 %v910, 0.0
    %v961 = vmax.f32 %v913, 0.0
    %v962 = vmax.f32 %v918, 0.0
    %v963 = vmax.f32 %v921, 0.0
    %v964 = vmax.f32 %v926, 0.0
    %v965 = vmax.f32 %v929, 0.0
    %v966 = vmax.f32 %v934, 0.0
    %v967 = vmax.f32 %v937, 0.0
    %v968 = vmax.f32 %v942, 0.0
    %v969 = vmax.f32 %v945, 0.0
    %v970 = vmax.f32 %v950, 0.0
    %v971 = vmax.f32 %v953, 0.0
    %v972 = vpack.c.bf16 %v957, %v956
    %v973 = vpack.c.bf16 %v959, %v958
    %v974 = vpack.c.bf16 %v961, %v960
    %v975 = vpack.c.bf16 %v963, %v962
    %v976 = vpack.c.bf16 %v965, %v964
    %v977 = vpack.c.bf16 %v967, %v966
    %v978 = vpack.c.bf16 %v969, %v968
    %v979 = vpack.c.bf16 %v971, %v970
    %v981 = vlaneseq
    %v982 = vshrl.u32 %v981, 7
    %v983 = vsub.s32 0, %v982
    %v984 = vrot.slane %v100, %v983
    %v985 = vlaneseq
    %v986 = vshrl.u32 %v985, 7
    %v987 = vsub.s32 1, %v986
    %v988 = vrot.slane %v100, %v987
    %v991 = vunpack.c.l.b16 %v93
    %v992 = vunpack.c.l.b16 %v94
    %v993 = vpack.c.b16 %v992, %v991
    %994 = vrot.lane.b32.xlu0 %v716, 96
    %v995 = vpop.permute.xlu0 %994
    %996 = vrot.lane.b32.xlu0 %v993, 96
    %v997 = vpop.permute.xlu0 %996
    %1000 = vrot.lane.b32.xlu0 %v984, 88
    %v1001 = vpop.permute.xlu0 %1000
    %1002 = vrot.lane.b32.xlu0 %v988, 88
    %v1003 = vpop.permute.xlu0 %1002
    %vm1004 = vcmask 719872
    %v1005 = vsel %vm1004, %v1001, %v1003
    %vm1007 = vcmask 261120
    %v1009 = vsel %vm1007, %v972, 0
    %v1012 = vsel %vm1007, %v973, 0
    %v1015 = vsel %vm1007, %v974, 0
    %v1018 = vsel %vm1007, %v975, 0
    %v1021 = vsel %vm1007, %v976, 0
    %v1024 = vsel %vm1007, %v977, 0
    %v1027 = vsel %vm1007, %v978, 0
    %v1030 = vsel %vm1007, %v979, 0
    %1032 = vmatprep.subr.bf16.mxu0 0
    %1033 = vmatpush1.bf16.msra.mxu0 0
    %1034 = vmatprep.subr.bf16.mxu0 0
    %1035 = vmatpush1.bf16.msra.mxu0 0
    %1036 = vmatprep.subr.bf16.mxu0 0
    %1037 = vmatpush1.bf16.msra.mxu0 0
    %1038 = vmatprep.subr.bf16.mxu0 0
    %1039 = vmatpush1.bf16.msra.mxu0 0
    %1040 = vmatprep.subr.bf16.mxu0 0
    %1041 = vmatpush1.bf16.msra.mxu0 0
    %1042 = vmatprep.subr.bf16.mxu0 0
    %1043 = vmatpush1.bf16.msra.mxu0 0
    %1044 = vmatprep.subr.bf16.mxu0 0
    %1045 = vmatpush1.bf16.msra.mxu0 %v997
    %1046 = vmatprep.subr.bf16.mxu0 0
    %1047 = vmatpush1.bf16.msra.mxu0 %v995
    %1048 = vmatprep.subr.bf16.mxu0 0
    %1049 = vmatpush2.bf16.msra.mxu0 0
    %1050 = vmatprep.subr.bf16.mxu0 0
    %1051 = vmatpush2.bf16.msra.mxu0 0
    %1052 = vmatprep.subr.bf16.mxu0 0
    %1053 = vmatpush2.bf16.msra.mxu0 0
    %1054 = vmatprep.subr.bf16.mxu0 0
    %1055 = vmatpush2.bf16.msra.mxu0 0
    %1056 = vmatprep.subr.bf16.mxu0 0
    %1057 = vmatpush2.bf16.msra.mxu0 0
    %1058 = vmatprep.subr.bf16.mxu0 0
    %1059 = vmatpush2.bf16.msra.mxu0 0
    %1060 = vmatprep.subr.bf16.mxu0 0
    %1061 = vmatpush2.bf16.msra.mxu0 0
    %1062 = vmatprep.subr.bf16.mxu0 0
    %1063 = vmatpush2.bf16.msra.mxu0 0
    %1064 = vmatprep.mubr.bf16.mxu0 0
    %1065 = vmatmul.mubr.bf16.gmra.mxu0 %v1009
    %v1066 = vpop.f32.mrf.mxu0
    %v1067 = vadd.f32 %v1005, %v1066
    %v1068 = vpop.f32.mrf.mxu0
    %v1069 = vpop.f32.mrf.mxu0
    %v1070 = vadd.f32 %v1005, %v1069
    %v1071 = vpop.f32.mrf.mxu0
    %1072 = vmatprep.mubr.bf16.mxu0 0
    %1073 = vmatmul.mubr.bf16.gmra.mxu0 %v1012
    %v1074 = vpop.f32.mrf.mxu0
    %v1075 = vadd.f32 %v1005, %v1074
    %v1076 = vpop.f32.mrf.mxu0
    %v1077 = vpop.f32.mrf.mxu0
    %v1078 = vadd.f32 %v1005, %v1077
    %v1079 = vpop.f32.mrf.mxu0
    %1080 = vmatprep.mubr.bf16.mxu0 0
    %1081 = vmatmul.mubr.bf16.gmra.mxu0 %v1015
    %v1082 = vpop.f32.mrf.mxu0
    %v1083 = vadd.f32 %v1005, %v1082
    %v1084 = vpop.f32.mrf.mxu0
    %v1085 = vpop.f32.mrf.mxu0
    %v1086 = vadd.f32 %v1005, %v1085
    %v1087 = vpop.f32.mrf.mxu0
    %1088 = vmatprep.mubr.bf16.mxu0 0
    %1089 = vmatmul.mubr.bf16.gmra.mxu0 %v1018
    %v1090 = vpop.f32.mrf.mxu0
    %v1091 = vadd.f32 %v1005, %v1090
    %v1092 = vpop.f32.mrf.mxu0
    %v1093 = vpop.f32.mrf.mxu0
    %v1094 = vadd.f32 %v1005, %v1093
    %v1095 = vpop.f32.mrf.mxu0
    %1096 = vmatprep.mubr.bf16.mxu0 0
    %1097 = vmatmul.mubr.bf16.gmra.mxu0 %v1021
    %v1098 = vpop.f32.mrf.mxu0
    %v1099 = vadd.f32 %v1005, %v1098
    %v1100 = vpop.f32.mrf.mxu0
    %v1101 = vpop.f32.mrf.mxu0
    %v1102 = vadd.f32 %v1005, %v1101
    %v1103 = vpop.f32.mrf.mxu0
    %1104 = vmatprep.mubr.bf16.mxu0 0
    %1105 = vmatmul.mubr.bf16.gmra.mxu0 %v1024
    %v1106 = vpop.f32.mrf.mxu0
    %v1107 = vadd.f32 %v1005, %v1106
    %v1108 = vpop.f32.mrf.mxu0
    %v1109 = vpop.f32.mrf.mxu0
    %v1110 = vadd.f32 %v1005, %v1109
    %v1111 = vpop.f32.mrf.mxu0
    %1112 = vmatprep.mubr.bf16.mxu0 0
    %1113 = vmatmul.mubr.bf16.gmra.mxu0 %v1027
    %v1114 = vpop.f32.mrf.mxu0
    %v1115 = vadd.f32 %v1005, %v1114
    %v1116 = vpop.f32.mrf.mxu0
    %v1117 = vpop.f32.mrf.mxu0
    %v1118 = vadd.f32 %v1005, %v1117
    %v1119 = vpop.f32.mrf.mxu0
    %1120 = vmatprep.mubr.bf16.mxu0 0
    %1121 = vmatmul.mubr.bf16.gmra.mxu0 %v1030
    %v1122 = vpop.f32.mrf.mxu0
    %v1123 = vadd.f32 %v1005, %v1122
    %v1124 = vpop.f32.mrf.mxu0
    %v1125 = vpop.f32.mrf.mxu0
    %v1126 = vadd.f32 %v1005, %v1125
    %v1127 = vpop.f32.mrf.mxu0
    %1128 = vdwg.mxu0
    %v1129 = vpack.c.bf16 %v1070, %v1067
    %v1130 = vpack.c.bf16 %v1078, %v1075
    %v1131 = vpack.c.bf16 %v1086, %v1083
    %v1132 = vpack.c.bf16 %v1094, %v1091
    %v1133 = vpack.c.bf16 %v1102, %v1099
    %v1134 = vpack.c.bf16 %v1110, %v1107
    %v1135 = vpack.c.bf16 %v1118, %v1115
    %v1136 = vpack.c.bf16 %v1126, %v1123
    %1145 = vrot.lane.b32.xlu0 %v1129, 96
    %v1146 = vpop.permute.xlu0 %1145
    %1147 = vrot.lane.b32.xlu0 %v1130, 96
    %v1148 = vpop.permute.xlu0 %1147
    %1149 = vrot.lane.b32.xlu0 %v1131, 96
    %v1150 = vpop.permute.xlu0 %1149
    %1151 = vrot.lane.b32.xlu0 %v1132, 96
    %v1152 = vpop.permute.xlu0 %1151
    %1153 = vrot.lane.b32.xlu0 %v1133, 96
    %v1154 = vpop.permute.xlu0 %1153
    %1155 = vrot.lane.b32.xlu0 %v1134, 96
    %v1156 = vpop.permute.xlu0 %1155
    %1157 = vrot.lane.b32.xlu0 %v1135, 96
    %v1158 = vpop.permute.xlu0 %1157
    %1159 = vrot.lane.b32.xlu0 %v1136, 96
    %v1160 = vpop.permute.xlu0 %1159
    %v1162 = vsel %vm1007, %v1129, 0
    %v1165 = vsel %vm1007, %v1130, 0
    %v1168 = vsel %vm1007, %v1131, 0
    %v1171 = vsel %vm1007, %v1132, 0
    %v1174 = vsel %vm1007, %v1133, 0
    %v1177 = vsel %vm1007, %v1134, 0
    %v1180 = vsel %vm1007, %v1135, 0
    %v1183 = vsel %vm1007, %v1136, 0
    %v1186 = vsel %vm1007, %v1146, 0
    %v1189 = vsel %vm1007, %v1148, 0
    %v1192 = vsel %vm1007, %v1150, 0
    %v1195 = vsel %vm1007, %v1152, 0
    %v1198 = vsel %vm1007, %v1154, 0
    %v1201 = vsel %vm1007, %v1156, 0
    %v1204 = vsel %vm1007, %v1158, 0
    %v1207 = vsel %vm1007, %v1160, 0
    %1209 = vmatprep.subr.bf16.mxu0 0
    %1210 = vmatpush1.bf16.xpose.msra.mxu0 %v1207
    %1211 = vmatprep.subr.bf16.mxu0 0
    %1212 = vmatpush1.bf16.xpose.msra.mxu0 %v1204
    %1213 = vmatprep.subr.bf16.mxu0 0
    %1214 = vmatpush1.bf16.xpose.msra.mxu0 %v1201
    %1215 = vmatprep.subr.bf16.mxu0 0
    %1216 = vmatpush1.bf16.xpose.msra.mxu0 %v1198
    %1217 = vmatprep.subr.bf16.mxu0 0
    %1218 = vmatpush1.bf16.xpose.msra.mxu0 %v1195
    %1219 = vmatprep.subr.bf16.mxu0 0
    %1220 = vmatpush1.bf16.xpose.msra.mxu0 %v1192
    %1221 = vmatprep.subr.bf16.mxu0 0
    %1222 = vmatpush1.bf16.xpose.msra.mxu0 %v1189
    %1223 = vmatprep.subr.bf16.mxu0 0
    %1224 = vmatpush1.bf16.xpose.msra.mxu0 %v1186
    %1225 = vmatprep.subr.bf16.mxu0 0
    %1226 = vmatpush2.bf16.xpose.msra.mxu0 0
    %1227 = vmatprep.subr.bf16.mxu0 0
    %1228 = vmatpush2.bf16.xpose.msra.mxu0 0
    %1229 = vmatprep.subr.bf16.mxu0 0
    %1230 = vmatpush2.bf16.xpose.msra.mxu0 0
    %1231 = vmatprep.subr.bf16.mxu0 0
    %1232 = vmatpush2.bf16.xpose.msra.mxu0 0
    %1233 = vmatprep.subr.bf16.mxu0 0
    %1234 = vmatpush2.bf16.xpose.msra.mxu0 0
    %1235 = vmatprep.subr.bf16.mxu0 0
    %1236 = vmatpush2.bf16.xpose.msra.mxu0 0
    %1237 = vmatprep.subr.bf16.mxu0 0
    %1238 = vmatpush2.bf16.xpose.msra.mxu0 0
    %1239 = vmatprep.subr.bf16.mxu0 0
    %1240 = vmatpush2.bf16.xpose.msra.mxu0 0
    %1241 = vmatprep.mubr.bf16.mxu0 0
    %1242 = vmatmul.mubr.bf16.gmra.mxu0 %v1162
    %v1243 = vpop.f32.mrf.mxu0
    %v1244 = vadd.f32 0.0, %v1243
    %v1245 = vpop.f32.mrf.mxu0
    %v1246 = vpop.f32.mrf.mxu0
    %v1247 = vadd.f32 0.0, %v1246
    %v1248 = vpop.f32.mrf.mxu0
    %1249 = vmatprep.mubr.bf16.mxu0 0
    %1250 = vmatmul.mubr.bf16.gmra.mxu0 %v1165
    %v1251 = vpop.f32.mrf.mxu0
    %v1252 = vadd.f32 0.0, %v1251
    %v1253 = vpop.f32.mrf.mxu0
    %v1254 = vpop.f32.mrf.mxu0
    %v1255 = vadd.f32 0.0, %v1254
    %v1256 = vpop.f32.mrf.mxu0
    %1257 = vmatprep.mubr.bf16.mxu0 0
    %1258 = vmatmul.mubr.bf16.gmra.mxu0 %v1168
    %v1259 = vpop.f32.mrf.mxu0
    %v1260 = vadd.f32 0.0, %v1259
    %v1261 = vpop.f32.mrf.mxu0
    %v1262 = vpop.f32.mrf.mxu0
    %v1263 = vadd.f32 0.0, %v1262
    %v1264 = vpop.f32.mrf.mxu0
    %1265 = vmatprep.mubr.bf16.mxu0 0
    %1266 = vmatmul.mubr.bf16.gmra.mxu0 %v1171
    %v1267 = vpop.f32.mrf.mxu0
    %v1268 = vadd.f32 0.0, %v1267
    %v1269 = vpop.f32.mrf.mxu0
    %v1270 = vpop.f32.mrf.mxu0
    %v1271 = vadd.f32 0.0, %v1270
    %v1272 = vpop.f32.mrf.mxu0
    %1273 = vmatprep.mubr.bf16.mxu0 0
    %1274 = vmatmul.mubr.bf16.gmra.mxu0 %v1174
    %v1275 = vpop.f32.mrf.mxu0
    %v1276 = vadd.f32 0.0, %v1275
    %v1277 = vpop.f32.mrf.mxu0
    %v1278 = vpop.f32.mrf.mxu0
    %v1279 = vadd.f32 0.0, %v1278
    %v1280 = vpop.f32.mrf.mxu0
    %1281 = vmatprep.mubr.bf16.mxu0 0
    %1282 = vmatmul.mubr.bf16.gmra.mxu0 %v1177
    %v1283 = vpop.f32.mrf.mxu0
    %v1284 = vadd.f32 0.0, %v1283
    %v1285 = vpop.f32.mrf.mxu0
    %v1286 = vpop.f32.mrf.mxu0
    %v1287 = vadd.f32 0.0, %v1286
    %v1288 = vpop.f32.mrf.mxu0
    %1289 = vmatprep.mubr.bf16.mxu0 0
    %1290 = vmatmul.mubr.bf16.gmra.mxu0 %v1180
    %v1291 = vpop.f32.mrf.mxu0
    %v1292 = vadd.f32 0.0, %v1291
    %v1293 = vpop.f32.mrf.mxu0
    %v1294 = vpop.f32.mrf.mxu0
    %v1295 = vadd.f32 0.0, %v1294
    %v1296 = vpop.f32.mrf.mxu0
    %1297 = vmatprep.mubr.bf16.mxu0 0
    %1298 = vmatmul.mubr.bf16.gmra.mxu0 %v1183
    %v1299 = vpop.f32.mrf.mxu0
    %v1300 = vadd.f32 0.0, %v1299
    %v1301 = vpop.f32.mrf.mxu0
    %v1302 = vpop.f32.mrf.mxu0
    %v1303 = vadd.f32 0.0, %v1302
    %v1304 = vpop.f32.mrf.mxu0
    %1305 = vdwg.mxu0
    %v1306 = vmul.f32 %v696, %v1244
    %v1307 = vmul.f32 %v697, %v1247
    %v1308 = vmul.f32 %v698, %v1252
    %v1309 = vmul.f32 %v699, %v1255
    %v1310 = vmul.f32 %v700, %v1260
    %v1311 = vmul.f32 %v701, %v1263
    %v1312 = vmul.f32 %v702, %v1268
    %v1313 = vmul.f32 %v703, %v1271
    %v1314 = vmul.f32 %v704, %v1276
    %v1315 = vmul.f32 %v705, %v1279
    %v1316 = vmul.f32 %v706, %v1284
    %v1317 = vmul.f32 %v707, %v1287
    %v1318 = vmul.f32 %v708, %v1292
    %v1319 = vmul.f32 %v709, %v1295
    %v1320 = vmul.f32 %v710, %v1300
    %v1321 = vmul.f32 %v711, %v1303
    %1322 = vmax.xlane.f32.xlu0 %v1306
    %v1323 = vpop.xlane.xlu0 %1322
    %1324 = vmax.xlane.f32.xlu0 %v1307
    %v1325 = vpop.xlane.xlu0 %1324
    %1326 = vmax.xlane.f32.xlu0 %v1308
    %v1327 = vpop.xlane.xlu0 %1326
    %1328 = vmax.xlane.f32.xlu0 %v1309
    %v1329 = vpop.xlane.xlu0 %1328
    %1330 = vmax.xlane.f32.xlu0 %v1310
    %v1331 = vpop.xlane.xlu0 %1330
    %1332 = vmax.xlane.f32.xlu0 %v1311
    %v1333 = vpop.xlane.xlu0 %1332
    %1334 = vmax.xlane.f32.xlu0 %v1312
    %v1335 = vpop.xlane.xlu0 %1334
    %1336 = vmax.xlane.f32.xlu0 %v1313
    %v1337 = vpop.xlane.xlu0 %1336
    %1338 = vmax.xlane.f32.xlu0 %v1314
    %v1339 = vpop.xlane.xlu0 %1338
    %1340 = vmax.xlane.f32.xlu0 %v1315
    %v1341 = vpop.xlane.xlu0 %1340
    %1342 = vmax.xlane.f32.xlu0 %v1316
    %v1343 = vpop.xlane.xlu0 %1342
    %1344 = vmax.xlane.f32.xlu0 %v1317
    %v1345 = vpop.xlane.xlu0 %1344
    %1346 = vmax.xlane.f32.xlu0 %v1318
    %v1347 = vpop.xlane.xlu0 %1346
    %1348 = vmax.xlane.f32.xlu0 %v1319
    %v1349 = vpop.xlane.xlu0 %1348
    %1350 = vmax.xlane.f32.xlu0 %v1320
    %v1351 = vpop.xlane.xlu0 %1350
    %1352 = vmax.xlane.f32.xlu0 %v1321
    %v1353 = vpop.xlane.xlu0 %1352
    %v1354 = vsub.f32 %v1306, %v1323
    %v1355 = vsub.f32 %v1307, %v1325
    %v1356 = vsub.f32 %v1308, %v1327
    %v1357 = vsub.f32 %v1309, %v1329
    %v1358 = vsub.f32 %v1310, %v1331
    %v1359 = vsub.f32 %v1311, %v1333
    %v1360 = vsub.f32 %v1312, %v1335
    %v1361 = vsub.f32 %v1313, %v1337
    %v1362 = vsub.f32 %v1314, %v1339
    %v1363 = vsub.f32 %v1315, %v1341
    %v1364 = vsub.f32 %v1316, %v1343
    %v1365 = vsub.f32 %v1317, %v1345
    %v1366 = vsub.f32 %v1318, %v1347
    %v1367 = vsub.f32 %v1319, %v1349
    %v1368 = vsub.f32 %v1320, %v1351
    %v1369 = vsub.f32 %v1321, %v1353
    %v1370 = vmul.f32 %v1354, 1.442695
    %v1371 = vpow.pop %v1370
    %v1372 = vmul.f32 %v1355, 1.442695
    %v1373 = vpow.pop %v1372
    %v1374 = vmul.f32 %v1356, 1.442695
    %v1375 = vpow.pop %v1374
    %v1376 = vmul.f32 %v1357, 1.442695
    %v1377 = vpow.pop %v1376
    %v1378 = vmul.f32 %v1358, 1.442695
    %v1379 = vpow.pop %v1378
    %v1380 = vmul.f32 %v1359, 1.442695
    %v1381 = vpow.pop %v1380
    %v1382 = vmul.f32 %v1360, 1.442695
    %v1383 = vpow.pop %v1382
    %v1384 = vmul.f32 %v1361, 1.442695
    %v1385 = vpow.pop %v1384
    %v1386 = vmul.f32 %v1362, 1.442695
    %v1387 = vpow.pop %v1386
    %v1388 = vmul.f32 %v1363, 1.442695
    %v1389 = vpow.pop %v1388
    %v1390 = vmul.f32 %v1364, 1.442695
    %v1391 = vpow.pop %v1390
    %v1392 = vmul.f32 %v1365, 1.442695
    %v1393 = vpow.pop %v1392
    %v1394 = vmul.f32 %v1366, 1.442695
    %v1395 = vpow.pop %v1394
    %v1396 = vmul.f32 %v1367, 1.442695
    %v1397 = vpow.pop %v1396
    %v1398 = vmul.f32 %v1368, 1.442695
    %v1399 = vpow.pop %v1398
    %v1400 = vmul.f32 %v1369, 1.442695
    %v1401 = vpow.pop %v1400
    %1402 = vadd.xlane.f32.xlu0 %v1371
    %v1403 = vpop.xlane.xlu0 %1402
    %1404 = vadd.xlane.f32.xlu0 %v1373
    %v1405 = vpop.xlane.xlu0 %1404
    %1406 = vadd.xlane.f32.xlu0 %v1375
    %v1407 = vpop.xlane.xlu0 %1406
    %1408 = vadd.xlane.f32.xlu0 %v1377
    %v1409 = vpop.xlane.xlu0 %1408
    %1410 = vadd.xlane.f32.xlu0 %v1379
    %v1411 = vpop.xlane.xlu0 %1410
    %1412 = vadd.xlane.f32.xlu0 %v1381
    %v1413 = vpop.xlane.xlu0 %1412
    %1414 = vadd.xlane.f32.xlu0 %v1383
    %v1415 = vpop.xlane.xlu0 %1414
    %1416 = vadd.xlane.f32.xlu0 %v1385
    %v1417 = vpop.xlane.xlu0 %1416
    %1418 = vadd.xlane.f32.xlu0 %v1387
    %v1419 = vpop.xlane.xlu0 %1418
    %1420 = vadd.xlane.f32.xlu0 %v1389
    %v1421 = vpop.xlane.xlu0 %1420
    %1422 = vadd.xlane.f32.xlu0 %v1391
    %v1423 = vpop.xlane.xlu0 %1422
    %1424 = vadd.xlane.f32.xlu0 %v1393
    %v1425 = vpop.xlane.xlu0 %1424
    %1426 = vadd.xlane.f32.xlu0 %v1395
    %v1427 = vpop.xlane.xlu0 %1426
    %1428 = vadd.xlane.f32.xlu0 %v1397
    %v1429 = vpop.xlane.xlu0 %1428
    %1430 = vadd.xlane.f32.xlu0 %v1399
    %v1431 = vpop.xlane.xlu0 %1430
    %1432 = vadd.xlane.f32.xlu0 %v1401
    %v1433 = vpop.xlane.xlu0 %1432
    %v1434 = vrcp.pop %v1403
    %v1435 = vrcp.pop %v1405
    %v1436 = vrcp.pop %v1407
    %v1437 = vrcp.pop %v1409
    %v1438 = vrcp.pop %v1411
    %v1439 = vrcp.pop %v1413
    %v1440 = vrcp.pop %v1415
    %v1441 = vrcp.pop %v1417
    %v1442 = vrcp.pop %v1419
    %v1443 = vrcp.pop %v1421
    %v1444 = vrcp.pop %v1423
    %v1445 = vrcp.pop %v1425
    %v1446 = vrcp.pop %v1427
    %v1447 = vrcp.pop %v1429
    %v1448 = vrcp.pop %v1431
    %v1449 = vrcp.pop %v1433
    %v1450 = vmul.f32 %v1371, %v1434
    %v1451 = vmul.f32 %v1373, %v1435
    %v1452 = vmul.f32 %v1375, %v1436
    %v1453 = vmul.f32 %v1377, %v1437
    %v1454 = vmul.f32 %v1379, %v1438
    %v1455 = vmul.f32 %v1381, %v1439
    %v1456 = vmul.f32 %v1383, %v1440
    %v1457 = vmul.f32 %v1385, %v1441
    %v1458 = vmul.f32 %v1387, %v1442
    %v1459 = vmul.f32 %v1389, %v1443
    %v1460 = vmul.f32 %v1391, %v1444
    %v1461 = vmul.f32 %v1393, %v1445
    %v1462 = vmul.f32 %v1395, %v1446
    %v1463 = vmul.f32 %v1397, %v1447
    %v1464 = vmul.f32 %v1399, %v1448
    %v1465 = vmul.f32 %v1401, %v1449
    %v1466 = vpack.c.bf16 %v1451, %v1450
    %v1467 = vpack.c.bf16 %v1453, %v1452
    %v1468 = vpack.c.bf16 %v1455, %v1454
    %v1469 = vpack.c.bf16 %v1457, %v1456
    %v1470 = vpack.c.bf16 %v1459, %v1458
    %v1471 = vpack.c.bf16 %v1461, %v1460
    %v1472 = vpack.c.bf16 %v1463, %v1462
    %v1473 = vpack.c.bf16 %v1465, %v1464
    %1474 = vrot.lane.b32.xlu0 %v1129, 64
    %v1475 = vpop.permute.xlu0 %1474
    %1476 = vrot.lane.b32.xlu0 %v1130, 64
    %v1477 = vpop.permute.xlu0 %1476
    %1478 = vrot.lane.b32.xlu0 %v1131, 64
    %v1479 = vpop.permute.xlu0 %1478
    %1480 = vrot.lane.b32.xlu0 %v1132, 64
    %v1481 = vpop.permute.xlu0 %1480
    %1482 = vrot.lane.b32.xlu0 %v1133, 64
    %v1483 = vpop.permute.xlu0 %1482
    %1484 = vrot.lane.b32.xlu0 %v1134, 64
    %v1485 = vpop.permute.xlu0 %1484
    %1486 = vrot.lane.b32.xlu0 %v1135, 64
    %v1487 = vpop.permute.xlu0 %1486
    %1488 = vrot.lane.b32.xlu0 %v1136, 64
    %v1489 = vpop.permute.xlu0 %1488
    %1498 = vmatprep.subr.bf16.mxu0 0
    %1499 = vmatpush1.bf16.msra.mxu0 %v1489
    %1500 = vmatprep.subr.bf16.mxu0 0
    %1501 = vmatpush1.bf16.msra.mxu0 %v1487
    %1502 = vmatprep.subr.bf16.mxu0 0
    %1503 = vmatpush1.bf16.msra.mxu0 %v1485
    %1504 = vmatprep.subr.bf16.mxu0 0
    %1505 = vmatpush1.bf16.msra.mxu0 %v1483
    %1506 = vmatprep.subr.bf16.mxu0 0
    %1507 = vmatpush1.bf16.msra.mxu0 %v1481
    %1508 = vmatprep.subr.bf16.mxu0 0
    %1509 = vmatpush1.bf16.msra.mxu0 %v1479
    %1510 = vmatprep.subr.bf16.mxu0 0
    %1511 = vmatpush1.bf16.msra.mxu0 %v1477
    %1512 = vmatprep.subr.bf16.mxu0 0
    %1513 = vmatpush1.bf16.msra.mxu0 %v1475
    %1514 = vmatprep.subr.bf16.mxu0 0
    %1515 = vmatpush2.bf16.msra.mxu0 0
    %1516 = vmatprep.subr.bf16.mxu0 0
    %1517 = vmatpush2.bf16.msra.mxu0 0
    %1518 = vmatprep.subr.bf16.mxu0 0
    %1519 = vmatpush2.bf16.msra.mxu0 0
    %1520 = vmatprep.subr.bf16.mxu0 0
    %1521 = vmatpush2.bf16.msra.mxu0 0
    %1522 = vmatprep.subr.bf16.mxu0 0
    %1523 = vmatpush2.bf16.msra.mxu0 0
    %1524 = vmatprep.subr.bf16.mxu0 0
    %1525 = vmatpush2.bf16.msra.mxu0 0
    %1526 = vmatprep.subr.bf16.mxu0 0
    %1527 = vmatpush2.bf16.msra.mxu0 0
    %1528 = vmatprep.subr.bf16.mxu0 0
    %1529 = vmatpush2.bf16.msra.mxu0 0
    %1530 = vmatprep.mubr.bf16.mxu0 0
    %1531 = vmatmul.mubr.bf16.gmra.mxu0 %v1466
    %v1532 = vpop.f32.mrf.mxu0
    %v1533 = vadd.f32 0.0, %v1532
    %v1534 = vpop.f32.mrf.mxu0
    %v1535 = vpop.f32.mrf.mxu0
    %v1536 = vadd.f32 0.0, %v1535
    %v1537 = vpop.f32.mrf.mxu0
    %1538 = vmatprep.mubr.bf16.mxu0 0
    %1539 = vmatmul.mubr.bf16.gmra.mxu0 %v1467
    %v1540 = vpop.f32.mrf.mxu0
    %v1541 = vadd.f32 0.0, %v1540
    %v1542 = vpop.f32.mrf.mxu0
    %v1543 = vpop.f32.mrf.mxu0
    %v1544 = vadd.f32 0.0, %v1543
    %v1545 = vpop.f32.mrf.mxu0
    %1546 = vmatprep.mubr.bf16.mxu0 0
    %1547 = vmatmul.mubr.bf16.gmra.mxu0 %v1468
    %v1548 = vpop.f32.mrf.mxu0
    %v1549 = vadd.f32 0.0, %v1548
    %v1550 = vpop.f32.mrf.mxu0
    %v1551 = vpop.f32.mrf.mxu0
    %v1552 = vadd.f32 0.0, %v1551
    %v1553 = vpop.f32.mrf.mxu0
    %1554 = vmatprep.mubr.bf16.mxu0 0
    %1555 = vmatmul.mubr.bf16.gmra.mxu0 %v1469
    %v1556 = vpop.f32.mrf.mxu0
    %v1557 = vadd.f32 0.0, %v1556
    %v1558 = vpop.f32.mrf.mxu0
    %v1559 = vpop.f32.mrf.mxu0
    %v1560 = vadd.f32 0.0, %v1559
    %v1561 = vpop.f32.mrf.mxu0
    %1562 = vmatprep.mubr.bf16.mxu0 0
    %1563 = vmatmul.mubr.bf16.gmra.mxu0 %v1470
    %v1564 = vpop.f32.mrf.mxu0
    %v1565 = vadd.f32 0.0, %v1564
    %v1566 = vpop.f32.mrf.mxu0
    %v1567 = vpop.f32.mrf.mxu0
    %v1568 = vadd.f32 0.0, %v1567
    %v1569 = vpop.f32.mrf.mxu0
    %1570 = vmatprep.mubr.bf16.mxu0 0
    %1571 = vmatmul.mubr.bf16.gmra.mxu0 %v1471
    %v1572 = vpop.f32.mrf.mxu0
    %v1573 = vadd.f32 0.0, %v1572
    %v1574 = vpop.f32.mrf.mxu0
    %v1575 = vpop.f32.mrf.mxu0
    %v1576 = vadd.f32 0.0, %v1575
    %v1577 = vpop.f32.mrf.mxu0
    %1578 = vmatprep.mubr.bf16.mxu0 0
    %1579 = vmatmul.mubr.bf16.gmra.mxu0 %v1472
    %v1580 = vpop.f32.mrf.mxu0
    %v1581 = vadd.f32 0.0, %v1580
    %v1582 = vpop.f32.mrf.mxu0
    %v1583 = vpop.f32.mrf.mxu0
    %v1584 = vadd.f32 0.0, %v1583
    %v1585 = vpop.f32.mrf.mxu0
    %1586 = vmatprep.mubr.bf16.mxu0 0
    %1587 = vmatmul.mubr.bf16.gmra.mxu0 %v1473
    %v1588 = vpop.f32.mrf.mxu0
    %v1589 = vadd.f32 0.0, %v1588
    %v1590 = vpop.f32.mrf.mxu0
    %v1591 = vpop.f32.mrf.mxu0
    %v1592 = vadd.f32 0.0, %v1591
    %v1593 = vpop.f32.mrf.mxu0
    %1594 = vdwg.mxu0
    %v1595 = vmax.f32 %v1533, 0.0
    %v1596 = vmax.f32 %v1536, 0.0
    %v1597 = vmax.f32 %v1541, 0.0
    %v1598 = vmax.f32 %v1544, 0.0
    %v1599 = vmax.f32 %v1549, 0.0
    %v1600 = vmax.f32 %v1552, 0.0
    %v1601 = vmax.f32 %v1557, 0.0
    %v1602 = vmax.f32 %v1560, 0.0
    %v1603 = vmax.f32 %v1565, 0.0
    %v1604 = vmax.f32 %v1568, 0.0
    %v1605 = vmax.f32 %v1573, 0.0
    %v1606 = vmax.f32 %v1576, 0.0
    %v1607 = vmax.f32 %v1581, 0.0
    %v1608 = vmax.f32 %v1584, 0.0
    %v1609 = vmax.f32 %v1589, 0.0
    %v1610 = vmax.f32 %v1592, 0.0
    %v1611 = vpack.c.bf16 %v1596, %v1595
    %v1612 = vpack.c.bf16 %v1598, %v1597
    %v1613 = vpack.c.bf16 %v1600, %v1599
    %v1614 = vpack.c.bf16 %v1602, %v1601
    %v1615 = vpack.c.bf16 %v1604, %v1603
    %v1616 = vpack.c.bf16 %v1606, %v1605
    %v1617 = vpack.c.bf16 %v1608, %v1607
    %v1618 = vpack.c.bf16 %v1610, %v1609
    %v1623 = vunpack.c.l.b16 %v95
    %v1624 = vunpack.c.l.b16 %v96
    %v1625 = vunpack.c.l.b16 %v97
    %v1626 = vunpack.c.l.b16 %v98
    %v1627 = vpack.c.b16 %v1624, %v1623
    %v1628 = vpack.c.b16 %v1626, %v1625
    %v1632 = vsel %vm1007, %v1611, 0
    %v1635 = vsel %vm1007, %v1612, 0
    %v1638 = vsel %vm1007, %v1613, 0
    %v1641 = vsel %vm1007, %v1614, 0
    %v1644 = vsel %vm1007, %v1615, 0
    %v1647 = vsel %vm1007, %v1616, 0
    %v1650 = vsel %vm1007, %v1617, 0
    %v1653 = vsel %vm1007, %v1618, 0
    %1655 = vmatprep.subr.bf16.mxu0 0
    %1656 = vmatpush1.bf16.msra.mxu0 0
    %1657 = vmatprep.subr.bf16.mxu0 0
    %1658 = vmatpush1.bf16.msra.mxu0 0
    %1659 = vmatprep.subr.bf16.mxu0 0
    %1660 = vmatpush1.bf16.msra.mxu0 0
    %1661 = vmatprep.subr.bf16.mxu0 0
    %1662 = vmatpush1.bf16.msra.mxu0 0
    %1663 = vmatprep.subr.bf16.mxu0 0
    %1664 = vmatpush1.bf16.msra.mxu0 0
    %1665 = vmatprep.subr.bf16.mxu0 0
    %1666 = vmatpush1.bf16.msra.mxu0 0
    %1667 = vmatprep.subr.bf16.mxu0 0
    %1668 = vmatpush1.bf16.msra.mxu0 %v1628
    %1669 = vmatprep.subr.bf16.mxu0 0
    %1670 = vmatpush1.bf16.msra.mxu0 %v1627
    %1671 = vmatprep.subr.bf16.mxu0 0
    %1672 = vmatpush2.bf16.msra.mxu0 0
    %1673 = vmatprep.subr.bf16.mxu0 0
    %1674 = vmatpush2.bf16.msra.mxu0 0
    %1675 = vmatprep.subr.bf16.mxu0 0
    %1676 = vmatpush2.bf16.msra.mxu0 0
    %1677 = vmatprep.subr.bf16.mxu0 0
    %1678 = vmatpush2.bf16.msra.mxu0 0
    %1679 = vmatprep.subr.bf16.mxu0 0
    %1680 = vmatpush2.bf16.msra.mxu0 0
    %1681 = vmatprep.subr.bf16.mxu0 0
    %1682 = vmatpush2.bf16.msra.mxu0 0
    %1683 = vmatprep.subr.bf16.mxu0 0
    %1684 = vmatpush2.bf16.msra.mxu0 0
    %1685 = vmatprep.subr.bf16.mxu0 0
    %1686 = vmatpush2.bf16.msra.mxu0 0
    %1687 = vmatprep.mubr.bf16.mxu0 0
    %1688 = vmatmul.mubr.bf16.gmra.mxu0 %v1632
    %v1689 = vpop.f32.mrf.mxu0
    %v1690 = vadd.f32 0.0, %v1689
    %v1691 = vpop.f32.mrf.mxu0
    %v1692 = vpop.f32.mrf.mxu0
    %v1693 = vadd.f32 0.0, %v1692
    %v1694 = vpop.f32.mrf.mxu0
    %1695 = vmatprep.mubr.bf16.mxu0 0
    %1696 = vmatmul.mubr.bf16.gmra.mxu0 %v1635
    %v1697 = vpop.f32.mrf.mxu0
    %v1698 = vadd.f32 0.0, %v1697
    %v1699 = vpop.f32.mrf.mxu0
    %v1700 = vpop.f32.mrf.mxu0
    %v1701 = vadd.f32 0.0, %v1700
    %v1702 = vpop.f32.mrf.mxu0
    %1703 = vmatprep.mubr.bf16.mxu0 0
    %1704 = vmatmul.mubr.bf16.gmra.mxu0 %v1638
    %v1705 = vpop.f32.mrf.mxu0
    %v1706 = vadd.f32 0.0, %v1705
    %v1707 = vpop.f32.mrf.mxu0
    %v1708 = vpop.f32.mrf.mxu0
    %v1709 = vadd.f32 0.0, %v1708
    %v1710 = vpop.f32.mrf.mxu0
    %1711 = vmatprep.mubr.bf16.mxu0 0
    %1712 = vmatmul.mubr.bf16.gmra.mxu0 %v1641
    %v1713 = vpop.f32.mrf.mxu0
    %v1714 = vadd.f32 0.0, %v1713
    %v1715 = vpop.f32.mrf.mxu0
    %v1716 = vpop.f32.mrf.mxu0
    %v1717 = vadd.f32 0.0, %v1716
    %v1718 = vpop.f32.mrf.mxu0
    %1719 = vmatprep.mubr.bf16.mxu0 0
    %1720 = vmatmul.mubr.bf16.gmra.mxu0 %v1644
    %v1721 = vpop.f32.mrf.mxu0
    %v1722 = vadd.f32 0.0, %v1721
    %v1723 = vpop.f32.mrf.mxu0
    %v1724 = vpop.f32.mrf.mxu0
    %v1725 = vadd.f32 0.0, %v1724
    %v1726 = vpop.f32.mrf.mxu0
    %1727 = vmatprep.mubr.bf16.mxu0 0
    %1728 = vmatmul.mubr.bf16.gmra.mxu0 %v1647
    %v1729 = vpop.f32.mrf.mxu0
    %v1730 = vadd.f32 0.0, %v1729
    %v1731 = vpop.f32.mrf.mxu0
    %v1732 = vpop.f32.mrf.mxu0
    %v1733 = vadd.f32 0.0, %v1732
    %v1734 = vpop.f32.mrf.mxu0
    %1735 = vmatprep.mubr.bf16.mxu0 0
    %1736 = vmatmul.mubr.bf16.gmra.mxu0 %v1650
    %v1737 = vpop.f32.mrf.mxu0
    %v1738 = vadd.f32 0.0, %v1737
    %v1739 = vpop.f32.mrf.mxu0
    %v1740 = vpop.f32.mrf.mxu0
    %v1741 = vadd.f32 0.0, %v1740
    %v1742 = vpop.f32.mrf.mxu0
    %1743 = vmatprep.mubr.bf16.mxu0 0
    %1744 = vmatmul.mubr.bf16.gmra.mxu0 %v1653
    %v1745 = vpop.f32.mrf.mxu0
    %v1746 = vadd.f32 0.0, %v1745
    %v1747 = vpop.f32.mrf.mxu0
    %v1748 = vpop.f32.mrf.mxu0
    %v1749 = vadd.f32 0.0, %v1748
    %v1750 = vpop.f32.mrf.mxu0
    %1751 = vdwg.mxu0
    %v1752 = vpack.c.bf16 %v1693, %v1690
    %v1753 = vpack.c.bf16 %v1701, %v1698
    %v1754 = vpack.c.bf16 %v1709, %v1706
    %v1755 = vpack.c.bf16 %v1717, %v1714
    %v1756 = vpack.c.bf16 %v1725, %v1722
    %v1757 = vpack.c.bf16 %v1733, %v1730
    %v1758 = vpack.c.bf16 %v1741, %v1738
    %v1759 = vpack.c.bf16 %v1749, %v1746
    %v1761 = vlaneseq
    %v1762 = vshrl.u32 %v1761, 7
    %v1763 = vsub.s32 0, %v1762
    %v1764 = vrot.slane %v101, %v1763
    %1765 = vrot.lane.b32.xlu0 %v1764, 120
    %v1766 = vpop.permute.xlu0 %1765
    %1768 = vmatprep.subr.bf16.mxu0 0
    %1769 = vmatpush1.bf16.msra.mxu0 %v1759
    %1770 = vmatprep.subr.bf16.mxu0 0
    %1771 = vmatpush1.bf16.msra.mxu0 %v1758
    %1772 = vmatprep.subr.bf16.mxu0 0
    %1773 = vmatpush1.bf16.msra.mxu0 %v1757
    %1774 = vmatprep.subr.bf16.mxu0 0
    %1775 = vmatpush1.bf16.msra.mxu0 %v1756
    %1776 = vmatprep.subr.bf16.mxu0 0
    %1777 = vmatpush1.bf16.msra.mxu0 %v1755
    %1778 = vmatprep.subr.bf16.mxu0 0
    %1779 = vmatpush1.bf16.msra.mxu0 %v1754
    %1780 = vmatprep.subr.bf16.mxu0 0
    %1781 = vmatpush1.bf16.msra.mxu0 %v1753
    %1782 = vmatprep.subr.bf16.mxu0 0
    %1783 = vmatpush1.bf16.msra.mxu0 %v1752
    %1784 = vmatprep.subr.bf16.mxu0 0
    %1785 = vmatpush2.bf16.msra.mxu0 0
    %1786 = vmatprep.subr.bf16.mxu0 0
    %1787 = vmatpush2.bf16.msra.mxu0 0
    %1788 = vmatprep.subr.bf16.mxu0 0
    %1789 = vmatpush2.bf16.msra.mxu0 0
    %1790 = vmatprep.subr.bf16.mxu0 0
    %1791 = vmatpush2.bf16.msra.mxu0 0
    %1792 = vmatprep.subr.bf16.mxu0 0
    %1793 = vmatpush2.bf16.msra.mxu0 0
    %1794 = vmatprep.subr.bf16.mxu0 0
    %1795 = vmatpush2.bf16.msra.mxu0 0
    %1796 = vmatprep.subr.bf16.mxu0 0
    %1797 = vmatpush2.bf16.msra.mxu0 0
    %1798 = vmatprep.subr.bf16.mxu0 0
    %1799 = vmatpush2.bf16.msra.mxu0 0
    %1800 = vmatprep.mubr.bf16.mxu0 0
    %1801 = vmatmul.mubr.bf16.gmra.mxu0 %v840
    %v1802 = vpop.f32.mrf.mxu0
    %v1803 = vadd.f32 %v1766, %v1802
    %v1804 = vpop.f32.mrf.mxu0
    %v1805 = vpop.f32.mrf.mxu0
    %v1806 = vadd.f32 %v1766, %v1805
    %v1807 = vpop.f32.mrf.mxu0
    %1808 = vmatprep.mubr.bf16.mxu0 0
    %1809 = vmatmul.mubr.bf16.gmra.mxu0 %v841
    %v1810 = vpop.f32.mrf.mxu0
    %v1811 = vadd.f32 %v1766, %v1810
    %v1812 = vpop.f32.mrf.mxu0
    %v1813 = vpop.f32.mrf.mxu0
    %v1814 = vadd.f32 %v1766, %v1813
    %v1815 = vpop.f32.mrf.mxu0
    %1816 = vmatprep.mubr.bf16.mxu0 0
    %1817 = vmatmul.mubr.bf16.gmra.mxu0 %v842
    %v1818 = vpop.f32.mrf.mxu0
    %v1819 = vadd.f32 %v1766, %v1818
    %v1820 = vpop.f32.mrf.mxu0
    %v1821 = vpop.f32.mrf.mxu0
    %v1822 = vadd.f32 %v1766, %v1821
    %v1823 = vpop.f32.mrf.mxu0
    %1824 = vmatprep.mubr.bf16.mxu0 0
    %1825 = vmatmul.mubr.bf16.gmra.mxu0 %v843
    %v1826 = vpop.f32.mrf.mxu0
    %v1827 = vadd.f32 %v1766, %v1826
    %v1828 = vpop.f32.mrf.mxu0
    %v1829 = vpop.f32.mrf.mxu0
    %v1830 = vadd.f32 %v1766, %v1829
    %v1831 = vpop.f32.mrf.mxu0
    %1832 = vmatprep.mubr.bf16.mxu0 0
    %1833 = vmatmul.mubr.bf16.gmra.mxu0 %v844
    %v1834 = vpop.f32.mrf.mxu0
    %v1835 = vadd.f32 %v1766, %v1834
    %v1836 = vpop.f32.mrf.mxu0
    %v1837 = vpop.f32.mrf.mxu0
    %v1838 = vadd.f32 %v1766, %v1837
    %v1839 = vpop.f32.mrf.mxu0
    %1840 = vmatprep.mubr.bf16.mxu0 0
    %1841 = vmatmul.mubr.bf16.gmra.mxu0 %v845
    %v1842 = vpop.f32.mrf.mxu0
    %v1843 = vadd.f32 %v1766, %v1842
    %v1844 = vpop.f32.mrf.mxu0
    %v1845 = vpop.f32.mrf.mxu0
    %v1846 = vadd.f32 %v1766, %v1845
    %v1847 = vpop.f32.mrf.mxu0
    %1848 = vmatprep.mubr.bf16.mxu0 0
    %1849 = vmatmul.mubr.bf16.gmra.mxu0 %v846
    %v1850 = vpop.f32.mrf.mxu0
    %v1851 = vadd.f32 %v1766, %v1850
    %v1852 = vpop.f32.mrf.mxu0
    %v1853 = vpop.f32.mrf.mxu0
    %v1854 = vadd.f32 %v1766, %v1853
    %v1855 = vpop.f32.mrf.mxu0
    %1856 = vmatprep.mubr.bf16.mxu0 0
    %1857 = vmatmul.mubr.bf16.gmra.mxu0 %v847
    %v1858 = vpop.f32.mrf.mxu0
    %v1859 = vadd.f32 %v1766, %v1858
    %v1860 = vpop.f32.mrf.mxu0
    %v1861 = vpop.f32.mrf.mxu0
    %v1862 = vadd.f32 %v1766, %v1861
    %v1863 = vpop.f32.mrf.mxu0
    %1864 = vdwg.mxu0
    %vm1865 = vcmask 64512
    %v1866 = vsel %vm1865, %v1803, -inf
    %1867 = vmax.xlane.f32.xlu0 %v1866
    %v1868 = vpop.xlane.xlu0 %1867
    %v1869 = vsel %vm1865, %v1806, -inf
    %1870 = vmax.xlane.f32.xlu0 %v1869
    %v1871 = vpop.xlane.xlu0 %1870
    %v1872 = vsel %vm1865, %v1811, -inf
    %1873 = vmax.xlane.f32.xlu0 %v1872
    %v1874 = vpop.xlane.xlu0 %1873
    %v1875 = vsel %vm1865, %v1814, -inf
    %1876 = vmax.xlane.f32.xlu0 %v1875
    %v1877 = vpop.xlane.xlu0 %1876
    %v1878 = vsel %vm1865, %v1819, -inf
    %1879 = vmax.xlane.f32.xlu0 %v1878
    %v1880 = vpop.xlane.xlu0 %1879
    %v1881 = vsel %vm1865, %v1822, -inf
    %1882 = vmax.xlane.f32.xlu0 %v1881
    %v1883 = vpop.xlane.xlu0 %1882
    %v1884 = vsel %vm1865, %v1827, -inf
    %1885 = vmax.xlane.f32.xlu0 %v1884
    %v1886 = vpop.xlane.xlu0 %1885
    %v1887 = vsel %vm1865, %v1830, -inf
    %1888 = vmax.xlane.f32.xlu0 %v1887
    %v1889 = vpop.xlane.xlu0 %1888
    %v1890 = vsel %vm1865, %v1835, -inf
    %1891 = vmax.xlane.f32.xlu0 %v1890
    %v1892 = vpop.xlane.xlu0 %1891
    %v1893 = vsel %vm1865, %v1838, -inf
    %1894 = vmax.xlane.f32.xlu0 %v1893
    %v1895 = vpop.xlane.xlu0 %1894
    %v1896 = vsel %vm1865, %v1843, -inf
    %1897 = vmax.xlane.f32.xlu0 %v1896
    %v1898 = vpop.xlane.xlu0 %1897
    %v1899 = vsel %vm1865, %v1846, -inf
    %1900 = vmax.xlane.f32.xlu0 %v1899
    %v1901 = vpop.xlane.xlu0 %1900
    %v1902 = vsel %vm1865, %v1851, -inf
    %1903 = vmax.xlane.f32.xlu0 %v1902
    %v1904 = vpop.xlane.xlu0 %1903
    %v1905 = vsel %vm1865, %v1854, -inf
    %1906 = vmax.xlane.f32.xlu0 %v1905
    %v1907 = vpop.xlane.xlu0 %1906
    %v1908 = vsel %vm1865, %v1859, -inf
    %1909 = vmax.xlane.f32.xlu0 %v1908
    %v1910 = vpop.xlane.xlu0 %1909
    %v1911 = vsel %vm1865, %v1862, -inf
    %1912 = vmax.xlane.f32.xlu0 %v1911
    %v1913 = vpop.xlane.xlu0 %1912
    %v1914 = vsub.f32 %v1803, %v1868
    %v1915 = vsub.f32 %v1806, %v1871
    %v1916 = vsub.f32 %v1811, %v1874
    %v1917 = vsub.f32 %v1814, %v1877
    %v1918 = vsub.f32 %v1819, %v1880
    %v1919 = vsub.f32 %v1822, %v1883
    %v1920 = vsub.f32 %v1827, %v1886
    %v1921 = vsub.f32 %v1830, %v1889
    %v1922 = vsub.f32 %v1835, %v1892
    %v1923 = vsub.f32 %v1838, %v1895
    %v1924 = vsub.f32 %v1843, %v1898
    %v1925 = vsub.f32 %v1846, %v1901
    %v1926 = vsub.f32 %v1851, %v1904
    %v1927 = vsub.f32 %v1854, %v1907
    %v1928 = vsub.f32 %v1859, %v1910
    %v1929 = vsub.f32 %v1862, %v1913
    %v1930 = vmul.f32 %v1914, 1.442695
    %v1931 = vpow.pop %v1930
    %v1932 = vmul.f32 %v1915, 1.442695
    %v1933 = vpow.pop %v1932
    %v1934 = vmul.f32 %v1916, 1.442695
    %v1935 = vpow.pop %v1934
    %v1936 = vmul.f32 %v1917, 1.442695
    %v1937 = vpow.pop %v1936
    %v1938 = vmul.f32 %v1918, 1.442695
    %v1939 = vpow.pop %v1938
    %v1940 = vmul.f32 %v1919, 1.442695
    %v1941 = vpow.pop %v1940
    %v1942 = vmul.f32 %v1920, 1.442695
    %v1943 = vpow.pop %v1942
    %v1944 = vmul.f32 %v1921, 1.442695
    %v1945 = vpow.pop %v1944
    %v1946 = vmul.f32 %v1922, 1.442695
    %v1947 = vpow.pop %v1946
    %v1948 = vmul.f32 %v1923, 1.442695
    %v1949 = vpow.pop %v1948
    %v1950 = vmul.f32 %v1924, 1.442695
    %v1951 = vpow.pop %v1950
    %v1952 = vmul.f32 %v1925, 1.442695
    %v1953 = vpow.pop %v1952
    %v1954 = vmul.f32 %v1926, 1.442695
    %v1955 = vpow.pop %v1954
    %v1956 = vmul.f32 %v1927, 1.442695
    %v1957 = vpow.pop %v1956
    %v1958 = vmul.f32 %v1928, 1.442695
    %v1959 = vpow.pop %v1958
    %v1960 = vmul.f32 %v1929, 1.442695
    %v1961 = vpow.pop %v1960
    %v1962 = vsel %vm1865, %v1931, 0.0
    %1963 = vadd.xlane.f32.xlu0 %v1962
    %v1964 = vpop.xlane.xlu0 %1963
    %v1965 = vsel %vm1865, %v1933, 0.0
    %1966 = vadd.xlane.f32.xlu0 %v1965
    %v1967 = vpop.xlane.xlu0 %1966
    %v1968 = vsel %vm1865, %v1935, 0.0
    %1969 = vadd.xlane.f32.xlu0 %v1968
    %v1970 = vpop.xlane.xlu0 %1969
    %v1971 = vsel %vm1865, %v1937, 0.0
    %1972 = vadd.xlane.f32.xlu0 %v1971
    %v1973 = vpop.xlane.xlu0 %1972
    %v1974 = vsel %vm1865, %v1939, 0.0
    %1975 = vadd.xlane.f32.xlu0 %v1974
    %v1976 = vpop.xlane.xlu0 %1975
    %v1977 = vsel %vm1865, %v1941, 0.0
    %1978 = vadd.xlane.f32.xlu0 %v1977
    %v1979 = vpop.xlane.xlu0 %1978
    %v1980 = vsel %vm1865, %v1943, 0.0
    %1981 = vadd.xlane.f32.xlu0 %v1980
    %v1982 = vpop.xlane.xlu0 %1981
    %v1983 = vsel %vm1865, %v1945, 0.0
    %1984 = vadd.xlane.f32.xlu0 %v1983
    %v1985 = vpop.xlane.xlu0 %1984
    %v1986 = vsel %vm1865, %v1947, 0.0
    %1987 = vadd.xlane.f32.xlu0 %v1986
    %v1988 = vpop.xlane.xlu0 %1987
    %v1989 = vsel %vm1865, %v1949, 0.0
    %1990 = vadd.xlane.f32.xlu0 %v1989
    %v1991 = vpop.xlane.xlu0 %1990
    %v1992 = vsel %vm1865, %v1951, 0.0
    %1993 = vadd.xlane.f32.xlu0 %v1992
    %v1994 = vpop.xlane.xlu0 %1993
    %v1995 = vsel %vm1865, %v1953, 0.0
    %1996 = vadd.xlane.f32.xlu0 %v1995
    %v1997 = vpop.xlane.xlu0 %1996
    %v1998 = vsel %vm1865, %v1955, 0.0
    %1999 = vadd.xlane.f32.xlu0 %v1998
    %v2000 = vpop.xlane.xlu0 %1999
    %v2001 = vsel %vm1865, %v1957, 0.0
    %2002 = vadd.xlane.f32.xlu0 %v2001
    %v2003 = vpop.xlane.xlu0 %2002
    %v2004 = vsel %vm1865, %v1959, 0.0
    %2005 = vadd.xlane.f32.xlu0 %v2004
    %v2006 = vpop.xlane.xlu0 %2005
    %v2007 = vsel %vm1865, %v1961, 0.0
    %2008 = vadd.xlane.f32.xlu0 %v2007
    %v2009 = vpop.xlane.xlu0 %2008
    %v2010 = vrcp.pop %v1964
    %v2011 = vmul.f32 %v1931, %v2010
    %v2012 = vrcp.pop %v1967
    %v2013 = vmul.f32 %v1933, %v2012
    %v2014 = vrcp.pop %v1970
    %v2015 = vmul.f32 %v1935, %v2014
    %v2016 = vrcp.pop %v1973
    %v2017 = vmul.f32 %v1937, %v2016
    %v2018 = vrcp.pop %v1976
    %v2019 = vmul.f32 %v1939, %v2018
    %v2020 = vrcp.pop %v1979
    %v2021 = vmul.f32 %v1941, %v2020
    %v2022 = vrcp.pop %v1982
    %v2023 = vmul.f32 %v1943, %v2022
    %v2024 = vrcp.pop %v1985
    %v2025 = vmul.f32 %v1945, %v2024
    %v2026 = vrcp.pop %v1988
    %v2027 = vmul.f32 %v1947, %v2026
    %v2028 = vrcp.pop %v1991
    %v2029 = vmul.f32 %v1949, %v2028
    %v2030 = vrcp.pop %v1994
    %v2031 = vmul.f32 %v1951, %v2030
    %v2032 = vrcp.pop %v1997
    %v2033 = vmul.f32 %v1953, %v2032
    %v2034 = vrcp.pop %v2000
    %v2035 = vmul.f32 %v1955, %v2034
    %v2036 = vrcp.pop %v2003
    %v2037 = vmul.f32 %v1957, %v2036
    %v2038 = vrcp.pop %v2006
    %v2039 = vmul.f32 %v1959, %v2038
    %v2040 = vrcp.pop %v2009
    %v2041 = vmul.f32 %v1961, %v2040
    %2042 = vst.msk [vmem:[%s6] sm:$0xff] %vm1865, %v2011
    %2043 = vst.msk [vmem:[%s6 + $0x8] sm:$0xff] %vm1865, %v2013
    %2044 = vst.msk [vmem:[%s6 + $0x10] sm:$0xff] %vm1865, %v2015
    %2045 = vst.msk [vmem:[%s6 + $0x18] sm:$0xff] %vm1865, %v2017
    %2046 = vst.msk [vmem:[%s6 + $0x20] sm:$0xff] %vm1865, %v2019
    %2047 = vst.msk [vmem:[%s6 + $0x28] sm:$0xff] %vm1865, %v2021
    %2048 = vst.msk [vmem:[%s6 + $0x30] sm:$0xff] %vm1865, %v2023
    %2049 = vst.msk [vmem:[%s6 + $0x38] sm:$0xff] %vm1865, %v2025
    %2050 = vst.msk [vmem:[%s6 + $0x40] sm:$0xff] %vm1865, %v2027
    %2051 = vst.msk [vmem:[%s6 + $0x48] sm:$0xff] %vm1865, %v2029
    %2052 = vst.msk [vmem:[%s6 + $0x50] sm:$0xff] %vm1865, %v2031
    %2053 = vst.msk [vmem:[%s6 + $0x58] sm:$0xff] %vm1865, %v2033
    %2054 = vst.msk [vmem:[%s6 + $0x60] sm:$0xff] %vm1865, %v2035
    %2055 = vst.msk [vmem:[%s6 + $0x68] sm:$0xff] %vm1865, %v2037
    %2056 = vst.msk [vmem:[%s6 + $0x70] sm:$0xff] %vm1865, %v2039
    %2057 = vst.msk [vmem:[%s6 + $0x78] sm:$0xff] %vm1865, %v2041
    // Predicated region
    $region26: #{gcn_attention_v2_forward.1} parent=1 // pred_check
      _
    $region27: #{gcn_attention_v2_forward.1} parent=1 // pred_check_branch
      %2059 = sbr.rel (0) target = $region29
    $region28: #{gcn_attention_v2_forward.1} parent=1 // pred_region
      _
    $region29: #{gcn_attention_v2_forward.1} parent=1 // pred_fallthru
      _
    // Predicated region
    $region30: #{gcn_attention_v2_forward.1} parent=1 // pred_check
      _
    $region31: #{gcn_attention_v2_forward.1} parent=1 // pred_check_branch
      %2061 = sbr.rel (0) target = $region33
    $region32: #{gcn_attention_v2_forward.1} parent=1 // pred_region
      %s2063 = ssub.s32 64, 64
      %2064 = vsyncadd [#allocation3], %s2063
      %s2066 = sshll.u32 [#allocation2], 4
      %s2067 = int_to_ptr.vmem [resolvable:$true] %s2066
      %2069 = dma.vmem_to_hbm [thread:$0]  %s2067, 64, %s7, [#allocation3]
    $region33: #{gcn_attention_v2_forward.1} parent=1 // pred_fallthru
      _
    // Predicated region
    $region34: #{gcn_attention_v2_forward.1} parent=1 // pred_check
      _
    $region35: #{gcn_attention_v2_forward.1} parent=1 // pred_check_branch
      %2071 = sbr.rel (0) target = $region37
    $region36: #{gcn_attention_v2_forward.1} parent=1 // pred_region
      _
    $region37: #{gcn_attention_v2_forward.1} parent=1 // pred_fallthru
      _
    // Predicated region
    $region38: #{gcn_attention_v2_forward.1} parent=1 // pred_check
      _
    $region39: #{gcn_attention_v2_forward.1} parent=1 // pred_check_branch
      %2073 = sbr.rel (0) target = $region41
    $region40: #{gcn_attention_v2_forward.1} parent=1 // pred_region
      %2074 = dma.done [#allocation3], 64
    $region41: #{gcn_attention_v2_forward.1} parent=1 // pred_fallthru
      _
    %2075 = vsyncpa [#allocation3], 1

</llo_original>
